<compile_context>
chip_gen: v5e
topology: v5e:2x2
jax: 0.10.0
libtpu: 0.0.40
codegen_flags: <defaults>
</compile_context>

<pallas_src>
import numpy as np
import jax
import jax.numpy as jnp
from jax.experimental import pallas as pl
from jax.experimental.pallas import tpu as pltpu


# ----------------------------------------------------------------------------
# Kernel: all S decode steps of the attention GRU cell in one invocation.
# ----------------------------------------------------------------------------
def attention_gru_decode_kernel(
        char_ids_ref,                       # SMEM (S, B) int32
        h0_ref,                             # (B, Hp)
        batch_H_ref,                        # (B, T, D)
        w_i2h_ref,                          # (D, Hp)
        w_score_ref,                        # (1, 1, Hp)
        w_h_ref,                            # (Hp, 4*Hp)  [h2h | hh_r | hh_z | hh_n]
        b_h_ref,                            # (1, 4*Hp)
        w_x_ref,                            # (D, 3*Hp)   [ih_r | ih_z | ih_n]
        b_x_ref,                            # (1, 3*Hp)
        emb_ref,                            # (E, 1, 3*Hp) per-char gate contribution
        h_out_ref,                          # (S, B, Hp)
        alpha_out_ref):                     # (S, B, T, 1)
    f32 = jnp.float32
    S = h_out_ref.shape[0]
    B, T, D = batch_H_ref.shape
    Hp = h0_ref.shape[1]

    batch_H = batch_H_ref[...]                                     # (B, T, D)

    # Step-invariant i2h(batch_H): single 2-D MXU matmul, layout-free reshapes.
    proj = jnp.dot(batch_H.reshape(B * T, D), w_i2h_ref[...],
                   preferred_element_type=f32).reshape(B, T, Hp)   # (B, T, Hp)

    w_score = w_score_ref[...]                                     # (1, 1, Hp)
    w_h = w_h_ref[...]                                             # (Hp, 4*Hp)
    b_h = b_h_ref[...]                                             # (1, 4*Hp)
    w_x = w_x_ref[...]                                             # (D, 3*Hp)
    b_x = b_x_ref[...]                                             # (1, 3*Hp)

    h = h0_ref[...]                                                # (B, Hp)

    # Fully unrolled step loop (S is small / static).
    # TODO(synk): for large S switch to a grid axis or lax.fori_loop to bound code size.
    for s in range(S):
        # One fused matmul of prev_h: [h2h-proj | gh_r | gh_z | gh_n].
        h_all = jnp.dot(h, w_h, preferred_element_type=f32) + b_h  # (B, 4*Hp)
        hp   = h_all[:, 0 * Hp:1 * Hp]
        gh_r = h_all[:, 1 * Hp:2 * Hp]
        gh_z = h_all[:, 2 * Hp:3 * Hp]
        gh_n = h_all[:, 3 * Hp:4 * Hp]

        # ---- attention scores; T stays on the sublane axis throughout ----
        res = jnp.tanh(proj + hp[:, None, :])                      # (B, T, Hp)
        e = jnp.sum(res * w_score, axis=-1, keepdims=True)         # (B, T, 1)
        m = jnp.max(e, axis=1, keepdims=True)                      # (B, 1, 1)
        p = jnp.exp(e - m)
        denom = jnp.sum(p, axis=1, keepdims=True)
        alpha = p * pl.reciprocal(denom, approx=True)              # (B, T, 1)
        context = jnp.sum(alpha * batch_H, axis=1)                 # (B, D)

        # ---- per-character gate contribution: SMEM id -> VMEM row gather ----
        rows = [emb_ref[char_ids_ref[s, b]] for b in range(B)]     # each (1, 3*Hp)
        emb = jnp.concatenate(rows, axis=0)                        # (B, 3*Hp)

        # One fused matmul of context over all three gates.
        gx = jnp.dot(context, w_x, preferred_element_type=f32) + emb + b_x  # (B, 3*Hp)
        gx_r = gx[:, 0 * Hp:1 * Hp]
        gx_z = gx[:, 1 * Hp:2 * Hp]
        gx_n = gx[:, 2 * Hp:3 * Hp]

        # ---- GRU update (torch GRUCell gate order r, z, n; b_hn inside r*(.)) ----
        r = jax.nn.sigmoid(gx_r + gh_r)
        z = jax.nn.sigmoid(gx_z + gh_z)
        n = jnp.tanh(gx_n + r * gh_n)
        h = (1.0 - z) * n + z * h                                  # (B, Hp)

        h_out_ref[s] = h                                           # lane-dense store
        alpha_out_ref[s] = alpha                                   # (B, T, 1)


# ----------------------------------------------------------------------------
# Wrappers
# ----------------------------------------------------------------------------
def attention_gru_decode(prev_hidden, batch_H, char_ids, prep):
    """Run S attention-GRU decode steps in a single (grid-free) pallas_call.

    prev_hidden : (B, H)    initial hidden state
    batch_H     : (B, T, D) encoder features (constant across steps)
    char_ids    : (S, B)    int32 character ids per decode step (teacher forcing)
    prep        : kernel-layout params from prepare_params()

    Returns (h_seq (S, B, H), alpha_seq (S, B, T)).
    """
    S, B = char_ids.shape
    _, T, D = batch_H.shape
    H, Hp = prep["H"], prep["Hp"]

    # Pad the hidden state to 128 lanes (padded lanes stay exactly zero in-kernel).
    h0 = jnp.zeros((B, Hp), jnp.float32).at[:, :H].set(prev_hidden.astype(jnp.float32))

    vmem = pl.BlockSpec(memory_space=pltpu.MemorySpace.VMEM)
    smem = pl.BlockSpec(memory_space=pltpu.MemorySpace.SMEM)

    h_seq_p, alpha_seq = pl.pallas_call(
        attention_gru_decode_kernel,
        out_shape=(
            jax.ShapeDtypeStruct((S, B, Hp), jnp.float32),
            jax.ShapeDtypeStruct((S, B, T, 1), jnp.float32),
        ),
        in_specs=[smem] + [vmem] * 9,
        out_specs=(vmem, vmem),
        compiler_params=pltpu.CompilerParams(vmem_limit_bytes=32 << 20),
    )(char_ids.astype(jnp.int32),
      h0,
      batch_H.astype(jnp.float32),
      prep["w_i2h"], prep["w_score"], prep["w_h"], prep["b_h"],
      prep["w_x"], prep["b_x"], prep["emb"])

    # Slice the valid hidden lanes / squeeze alpha's trailing axis outside the kernel.
    return h_seq_p[:, :, :H], alpha_seq[:, :, :, 0]


def attention_gru_cell(prev_hidden, batch_H, char_onehots, prep):
    """Single step — matches the PyTorch forward signature and outputs."""
    char_ids = jnp.argmax(char_onehots, axis=-1).astype(jnp.int32)[None, :]   # (1, B)
    h_seq, alpha_seq = attention_gru_decode(prev_hidden, batch_H, char_ids, prep)
    h_new = h_seq[0]
    alpha = alpha_seq[0][:, None, :]      # torch returns alpha.permute(0,2,1): (B,1,T)
    return (h_new, h_new), alpha


# ----------------------------------------------------------------------------
# Parameter handling
# ----------------------------------------------------------------------------
def init_params(key, input_size, hidden_size, num_embeddings):
    """Torch-layout parameters (same shapes as the nn.Module's tensors)."""
    ks = jax.random.split(key, 8)
    s = 0.1
    H, D, E = hidden_size, input_size, num_embeddings
    return {
        "w_i2h": s * jax.random.normal(ks[0], (H, D), jnp.float32),      # i2h.weight
        "w_h2h": s * jax.random.normal(ks[1], (H, H), jnp.float32),      # h2h.weight
        "b_h2h": s * jax.random.normal(ks[2], (H,), jnp.float32),        # h2h.bias
        "w_score": s * jax.random.normal(ks[3], (1, H), jnp.float32),    # score.weight
        "w_ih": s * jax.random.normal(ks[4], (3 * H, D + E), jnp.float32),  # rnn.weight_ih
        "w_hh": s * jax.random.normal(ks[5], (3 * H, H), jnp.float32),   # rnn.weight_hh
        "b_ih": s * jax.random.normal(ks[6], (3 * H,), jnp.float32),     # rnn.bias_ih
        "b_hh": s * jax.random.normal(ks[7], (3 * H,), jnp.float32),     # rnn.bias_hh
    }


def prepare_params(p):
    """One-time conversion to fused, 128-lane-padded kernel layout (zero padding)."""
    H = int(p["w_h2h"].shape[0])
    D = int(p["w_i2h"].shape[1])
    w_ih = np.asarray(p["w_ih"], np.float32)
    w_hh = np.asarray(p["w_hh"], np.float32)
    E = w_ih.shape[1] - D
    Hp = ((H + 127) // 128) * 128

    def padded(w, rows, cols):
        out = np.zeros((rows, cols), np.float32)
        out[:w.shape[0], :w.shape[1]] = w
        return out

    # attention projections
    w_i2h_p = padded(np.asarray(p["w_i2h"], np.float32).T, D, Hp)            # (D, Hp)
    w_score_p = padded(np.asarray(p["w_score"], np.float32), 1, Hp).reshape(1, 1, Hp)

    # fused prev_h projection: [h2h | hh_r | hh_z | hh_n]  (contraction dim padded to Hp)
    w_hh_g = w_hh.reshape(3, H, H)
    w_h_fused = np.concatenate(
        [padded(np.asarray(p["w_h2h"], np.float32).T, Hp, Hp)]
        + [padded(w_hh_g[g].T, Hp, Hp) for g in range(3)], axis=1)           # (Hp, 4Hp)
    b_hh_g = np.asarray(p["b_hh"], np.float32).reshape(3, H)
    b_h_fused = np.concatenate(
        [padded(np.asarray(p["b_h2h"], np.float32).reshape(1, H), 1, Hp)]
        + [padded(b_hh_g[g].reshape(1, H), 1, Hp) for g in range(3)], axis=1)  # (1, 4Hp)

    # fused context projection + per-character embedding table
    w_ih_x = w_ih[:, :D].reshape(3, H, D)
    w_ih_e = w_ih[:, D:].reshape(3, H, E)
    w_x_fused = np.concatenate(
        [padded(w_ih_x[g].T, D, Hp) for g in range(3)], axis=1)              # (D, 3Hp)
    b_ih_g = np.asarray(p["b_ih"], np.float32).reshape(3, H)
    b_x_fused = np.concatenate(
        [padded(b_ih_g[g].reshape(1, H), 1, Hp) for g in range(3)], axis=1)  # (1, 3Hp)
    emb_table = np.concatenate(
        [padded(w_ih_e[g].T, E, Hp) for g in range(3)], axis=1)              # (E, 3Hp)
    emb_table = emb_table.reshape(E, 1, 3 * Hp)                              # (E, 1, 3Hp)

    return {
        "H": H, "Hp": Hp,
        "w_i2h": jnp.asarray(w_i2h_p),
        "w_score": jnp.asarray(w_score_p),
        "w_h": jnp.asarray(w_h_fused),
        "b_h": jnp.asarray(b_h_fused),
        "w_x": jnp.asarray(w_x_fused),
        "b_x": jnp.asarray(b_x_fused),
        "emb": jnp.asarray(emb_table),
    }


# ----------------------------------------------------------------------------
# Pure-JAX reference mirroring the PyTorch module semantics
# ----------------------------------------------------------------------------
def reference_step(prev_hidden, batch_H, char_onehots, p):
    H = p["w_h2h"].shape[0]
    proj = jnp.einsum("btd,hd->bth", batch_H, p["w_i2h"])
    hp = prev_hidden @ p["w_h2h"].T + p["b_h2h"]
    res = jnp.tanh(proj + hp[:, None, :])
    e = jnp.einsum("bth,oh->bto", res, p["w_score"])      # (B, T, 1)
    alpha = jax.nn.softmax(e, axis=1)
    alpha_p = jnp.transpose(alpha, (0, 2, 1))             # (B, 1, T)
    context = jnp.squeeze(alpha_p @ batch_H, axis=1)      # (B, D)
    x = jnp.concatenate([context, char_onehots.astype(jnp.float32)], axis=1)
    gx = x @ p["w_ih"].T + p["b_ih"]
    gh = prev_hidden @ p["w_hh"].T + p["b_hh"]
    r = jax.nn.sigmoid(gx[:, :H] + gh[:, :H])
    z = jax.nn.sigmoid(gx[:, H:2 * H] + gh[:, H:2 * H])
    n = jnp.tanh(gx[:, 2 * H:] + r * gh[:, 2 * H:])
    h_new = (1.0 - z) * n + z * prev_hidden
    return h_new, alpha_p


def reference_decode(prev_hidden, batch_H, onehots_seq, p):
    hs, alphas = [], []
    h = prev_hidden
    for s in range(onehots_seq.shape[0]):
        h, alpha_p = reference_step(h, batch_H, onehots_seq[s], p)
        hs.append(h)
        alphas.append(alpha_p[:, 0, :])    # (B, T)
    return jnp.stack(hs, axis=0), jnp.stack(alphas, axis=0)


# ----------------------------------------------------------------------------
if __name__ == "__main__":
    B, T = 2, 8                 # batch, num encoder time steps
    input_size = 96             # encoder feature size
    hidden_size = 96            # GRU hidden size (matches the module's global)
    num_embeddings = 38         # one-hot vocab size
    num_steps = 4               # decode steps fused into one pallas_call

    key = jax.random.PRNGKey(0)
    k_p, k_h, k_H, k_c = jax.random.split(key, 4)

    params = init_params(k_p, input_size, hidden_size, num_embeddings)
    prep = prepare_params(params)          # one-time fused/padded kernel layout

    prev_hidden = jax.random.normal(k_h, (B, hidden_size), jnp.float32)
    batch_H = jax.random.normal(k_H, (B, T, input_size), jnp.float32)
    char_ids = jax.random.randint(k_c, (num_steps, B), 0, num_embeddings).astype(jnp.int32)
    onehots_seq = jax.nn.one_hot(char_ids, num_embeddings, dtype=jnp.float32)

    # --- fused multi-step decode (weights, features and outputs stay VMEM-resident) ---
    h_seq, alpha_seq = attention_gru_decode(prev_hidden, batch_H, char_ids, prep)
    h_seq = jax.block_until_ready(h_seq)
    alpha_seq = jax.block_until_ready(alpha_seq)

    h_ref_seq, alpha_ref_seq = reference_decode(prev_hidden, batch_H, onehots_seq, params)

    assert h_seq.shape == (num_steps, B, hidden_size)
    assert alpha_seq.shape == (num_steps, B, T)
    np.testing.assert_allclose(np.asarray(h_seq), np.asarray(h_ref_seq),
                               rtol=1e-3, atol=1e-3)
    np.testing.assert_allclose(np.asarray(alpha_seq), np.asarray(alpha_ref_seq),
                               rtol=1e-3, atol=1e-3)

    # --- single-step API (matches the PyTorch forward signature) ---
    (h1, _), alpha1 = attention_gru_cell(prev_hidden, batch_H, onehots_seq[0], prep)
    h1 = jax.block_until_ready(h1)
    alpha1 = jax.block_until_ready(alpha1)
    h1_ref, alpha1_ref = reference_step(prev_hidden, batch_H, onehots_seq[0], params)

    assert h1.shape == (B, hidden_size)
    assert alpha1.shape == (B, 1, T)
    np.testing.assert_allclose(np.asarray(h1), np.asarray(h1_ref), rtol=1e-3, atol=1e-3)
    np.testing.assert_allclose(np.asarray(alpha1), np.asarray(alpha1_ref),
                               rtol=1e-3, atol=1e-3)

    print("KERNEL_OK")
</pallas_src>

<mosaic_0001>
module attributes {stable_mosaic.version = 11 : i64} {
  func.func @attention_gru_decode_kernel(%arg0: memref<4x2xi32, #tpu.memory_space<smem>>, %arg1: memref<2x128xf32, #tpu.memory_space<vmem>>, %arg2: memref<2x8x96xf32, #tpu.memory_space<vmem>>, %arg3: memref<96x128xf32, #tpu.memory_space<vmem>>, %arg4: memref<1x1x128xf32, #tpu.memory_space<vmem>>, %arg5: memref<128x512xf32, #tpu.memory_space<vmem>>, %arg6: memref<1x512xf32, #tpu.memory_space<vmem>>, %arg7: memref<96x384xf32, #tpu.memory_space<vmem>>, %arg8: memref<1x384xf32, #tpu.memory_space<vmem>>, %arg9: memref<38x1x384xf32, #tpu.memory_space<vmem>>, %arg10: memref<4x2x128xf32, #tpu.memory_space<vmem>>, %arg11: memref<4x2x8x1xf32, #tpu.memory_space<vmem>>) attributes {dimension_semantics = [], scalar_prefetch = 0 : i64, scratch_operands = 0 : i64, tpu.core_type = #tpu.core_type<tc>} {
    %c0 = arith.constant 0 : index
    %c0_0 = arith.constant 0 : index
    %c0_1 = arith.constant 0 : index
    %0 = vector.load %arg2[%c0, %c0_0, %c0_1] : memref<2x8x96xf32, #tpu.memory_space<vmem>>, vector<2x8x96xf32>
    %1 = vector.shape_cast %0 : vector<2x8x96xf32> to vector<16x96xf32>
    %c0_2 = arith.constant 0 : index
    %c0_3 = arith.constant 0 : index
    %2 = vector.load %arg3[%c0_2, %c0_3] : memref<96x128xf32, #tpu.memory_space<vmem>>, vector<96x128xf32>
    %cst = arith.constant dense<0.000000e+00> : vector<16x128xf32>
    %3 = tpu.matmul %1, %2, %cst {dimension_numbers = #tpu.dot_dimension_numbers<[1], [0], [0], [1], [0, 0, 1, 1], [], []>} : vector<16x96xf32>, vector<96x128xf32>, vector<16x128xf32> -> vector<16x128xf32>
    %4 = vector.shape_cast %3 : vector<16x128xf32> to vector<2x8x128xf32>
    %c0_4 = arith.constant 0 : index
    %c0_5 = arith.constant 0 : index
    %c0_6 = arith.constant 0 : index
    %5 = vector.load %arg4[%c0_4, %c0_5, %c0_6] : memref<1x1x128xf32, #tpu.memory_space<vmem>>, vector<1x1x128xf32>
    %c0_7 = arith.constant 0 : index
    %c0_8 = arith.constant 0 : index
    %6 = vector.load %arg5[%c0_7, %c0_8] : memref<128x512xf32, #tpu.memory_space<vmem>>, vector<128x512xf32>
    %c0_9 = arith.constant 0 : index
    %c0_10 = arith.constant 0 : index
    %7 = vector.load %arg6[%c0_9, %c0_10] : memref<1x512xf32, #tpu.memory_space<vmem>>, vector<1x512xf32>
    %c0_11 = arith.constant 0 : index
    %c0_12 = arith.constant 0 : index
    %8 = vector.load %arg7[%c0_11, %c0_12] : memref<96x384xf32, #tpu.memory_space<vmem>>, vector<96x384xf32>
    %c0_13 = arith.constant 0 : index
    %c0_14 = arith.constant 0 : index
    %9 = vector.load %arg8[%c0_13, %c0_14] : memref<1x384xf32, #tpu.memory_space<vmem>>, vector<1x384xf32>
    %c0_15 = arith.constant 0 : index
    %c0_16 = arith.constant 0 : index
    %10 = vector.load %arg1[%c0_15, %c0_16] : memref<2x128xf32, #tpu.memory_space<vmem>>, vector<2x128xf32>
    %cst_17 = arith.constant dense<0.000000e+00> : vector<2x512xf32>
    %11 = tpu.matmul %10, %6, %cst_17 {dimension_numbers = #tpu.dot_dimension_numbers<[1], [0], [0], [1], [0, 0, 1, 1], [], []>} : vector<2x128xf32>, vector<128x512xf32>, vector<2x512xf32> -> vector<2x512xf32>
    %12 = vector.broadcast %7 : vector<1x512xf32> to vector<2x512xf32>
    %13 = arith.addf %11, %12 : vector<2x512xf32>
    %14 = vector.extract_strided_slice %13 {offsets = [0, 0], sizes = [2, 128], strides = [1, 1]} : vector<2x512xf32> to vector<2x128xf32>
    %15 = vector.extract_strided_slice %13 {offsets = [0, 128], sizes = [2, 128], strides = [1, 1]} : vector<2x512xf32> to vector<2x128xf32>
    %16 = vector.extract_strided_slice %13 {offsets = [0, 256], sizes = [2, 128], strides = [1, 1]} : vector<2x512xf32> to vector<2x128xf32>
    %17 = vector.extract_strided_slice %13 {offsets = [0, 384], sizes = [2, 128], strides = [1, 1]} : vector<2x512xf32> to vector<2x128xf32>
    %18 = vector.shape_cast %14 : vector<2x128xf32> to vector<2x1x128xf32>
    %19 = vector.broadcast %18 : vector<2x1x128xf32> to vector<2x8x128xf32>
    %20 = arith.addf %4, %19 : vector<2x8x128xf32>
    %21 = math.tanh %20 : vector<2x8x128xf32>
    %22 = vector.broadcast %5 : vector<1x1x128xf32> to vector<2x8x128xf32>
    %23 = arith.mulf %21, %22 : vector<2x8x128xf32>
    %cst_18 = arith.constant dense<0.000000e+00> : vector<2x8xf32>
    %24 = vector.multi_reduction <add>, %23, %cst_18 [2] : vector<2x8x128xf32> to vector<2x8xf32>
    %25 = vector.shape_cast %24 : vector<2x8xf32> to vector<2x8x1xf32>
    %cst_19 = arith.constant dense<0xFF800000> : vector<2x1xf32>
    %26 = vector.multi_reduction <maximumf>, %25, %cst_19 [1] : vector<2x8x1xf32> to vector<2x1xf32>
    %27 = vector.shape_cast %26 : vector<2x1xf32> to vector<2x1x1xf32>
    %28 = vector.broadcast %27 : vector<2x1x1xf32> to vector<2x8x1xf32>
    %29 = arith.subf %25, %28 : vector<2x8x1xf32>
    %30 = math.exp %29 : vector<2x8x1xf32>
    %cst_20 = arith.constant dense<0.000000e+00> : vector<2x1xf32>
    %31 = vector.multi_reduction <add>, %30, %cst_20 [1] : vector<2x8x1xf32> to vector<2x1xf32>
    %32 = vector.shape_cast %31 : vector<2x1xf32> to vector<2x1x1xf32>
    %33 = tpu.reciprocal %32 {approx = true} : vector<2x1x1xf32> -> vector<2x1x1xf32>
    %34 = vector.broadcast %33 : vector<2x1x1xf32> to vector<2x8x1xf32>
    %35 = arith.mulf %30, %34 : vector<2x8x1xf32>
    %36 = vector.broadcast %35 : vector<2x8x1xf32> to vector<2x8x96xf32>
    %37 = arith.mulf %36, %0 : vector<2x8x96xf32>
    %cst_21 = arith.constant dense<0.000000e+00> : vector<2x96xf32>
    %38 = vector.multi_reduction <add>, %37, %cst_21 [1] : vector<2x8x96xf32> to vector<2x96xf32>
    %c0_22 = arith.constant 0 : index
    %c0_23 = arith.constant 0 : index
    %39 = memref.load %arg0[%c0_22, %c0_23] : memref<4x2xi32, #tpu.memory_space<smem>>
    %40 = arith.index_cast %39 : i32 to index
    %c0_24 = arith.constant 0 : index
    %c0_25 = arith.constant 0 : index
    %41 = vector.load %arg9[%40, %c0_24, %c0_25] : memref<38x1x384xf32, #tpu.memory_space<vmem>>, vector<1x1x384xf32>
    %42 = vector.shape_cast %41 : vector<1x1x384xf32> to vector<1x384xf32>
    %c0_26 = arith.constant 0 : index
    %c1 = arith.constant 1 : index
    %43 = memref.load %arg0[%c0_26, %c1] : memref<4x2xi32, #tpu.memory_space<smem>>
    %44 = arith.index_cast %43 : i32 to index
    %c0_27 = arith.constant 0 : index
    %c0_28 = arith.constant 0 : index
    %45 = vector.load %arg9[%44, %c0_27, %c0_28] : memref<38x1x384xf32, #tpu.memory_space<vmem>>, vector<1x1x384xf32>
    %46 = vector.shape_cast %45 : vector<1x1x384xf32> to vector<1x384xf32>
    %47 = tpu.concatenate %42, %46 in 0 : vector<1x384xf32>, vector<1x384xf32> -> vector<2x384xf32>
    %cst_29 = arith.constant dense<0.000000e+00> : vector<2x384xf32>
    %48 = tpu.matmul %38, %8, %cst_29 {dimension_numbers = #tpu.dot_dimension_numbers<[1], [0], [0], [1], [0, 0, 1, 1], [], []>} : vector<2x96xf32>, vector<96x384xf32>, vector<2x384xf32> -> vector<2x384xf32>
    %49 = arith.addf %48, %47 : vector<2x384xf32>
    %50 = vector.broadcast %9 : vector<1x384xf32> to vector<2x384xf32>
    %51 = arith.addf %49, %50 : vector<2x384xf32>
    %52 = vector.extract_strided_slice %51 {offsets = [0, 0], sizes = [2, 128], strides = [1, 1]} : vector<2x384xf32> to vector<2x128xf32>
    %53 = vector.extract_strided_slice %51 {offsets = [0, 128], sizes = [2, 128], strides = [1, 1]} : vector<2x384xf32> to vector<2x128xf32>
    %54 = vector.extract_strided_slice %51 {offsets = [0, 256], sizes = [2, 128], strides = [1, 1]} : vector<2x384xf32> to vector<2x128xf32>
    %55 = arith.addf %52, %15 : vector<2x128xf32>
    %56 = arith.negf %55 : vector<2x128xf32>
    %57 = math.exp %56 : vector<2x128xf32>
    %cst_30 = arith.constant 1.000000e+00 : f32
    %58 = vector.broadcast %cst_30 : f32 to vector<2x128xf32>
    %59 = arith.addf %58, %57 : vector<2x128xf32>
    %60 = arith.divf %58, %59 : vector<2x128xf32>
    %61 = arith.addf %53, %16 : vector<2x128xf32>
    %62 = arith.negf %61 : vector<2x128xf32>
    %63 = math.exp %62 : vector<2x128xf32>
    %cst_31 = arith.constant 1.000000e+00 : f32
    %64 = vector.broadcast %cst_31 : f32 to vector<2x128xf32>
    %65 = arith.addf %64, %63 : vector<2x128xf32>
    %66 = arith.divf %64, %65 : vector<2x128xf32>
    %67 = arith.mulf %60, %17 : vector<2x128xf32>
    %68 = arith.addf %54, %67 : vector<2x128xf32>
    %69 = math.tanh %68 : vector<2x128xf32>
    %cst_32 = arith.constant 1.000000e+00 : f32
    %70 = vector.broadcast %cst_32 : f32 to vector<2x128xf32>
    %71 = arith.subf %70, %66 : vector<2x128xf32>
    %72 = arith.mulf %71, %69 : vector<2x128xf32>
    %73 = arith.mulf %66, %10 : vector<2x128xf32>
    %74 = arith.addf %72, %73 : vector<2x128xf32>
    %c0_33 = arith.constant 0 : index
    %c0_34 = arith.constant 0 : index
    %c0_35 = arith.constant 0 : index
    %75 = vector.load %arg10[%c0_33, %c0_34, %c0_35] : memref<4x2x128xf32, #tpu.memory_space<vmem>>, vector<1x2x128xf32>
    %76 = vector.shape_cast %75 : vector<1x2x128xf32> to vector<2x128xf32>
    %77 = vector.shape_cast %74 : vector<2x128xf32> to vector<1x2x128xf32>
    tpu.vector_store %arg10[%c0_33, %c0_34, %c0_35], %77 {strides = array<i32>} : memref<4x2x128xf32, #tpu.memory_space<vmem>>, vector<1x2x128xf32>,
    %c0_36 = arith.constant 0 : index
    %c0_37 = arith.constant 0 : index
    %c0_38 = arith.constant 0 : index
    %c0_39 = arith.constant 0 : index
    %78 = vector.load %arg11[%c0_36, %c0_37, %c0_38, %c0_39] : memref<4x2x8x1xf32, #tpu.memory_space<vmem>>, vector<1x2x8x1xf32>
    %79 = vector.shape_cast %78 : vector<1x2x8x1xf32> to vector<2x8x1xf32>
    %80 = vector.shape_cast %35 : vector<2x8x1xf32> to vector<1x2x8x1xf32>
    tpu.vector_store %arg11[%c0_36, %c0_37, %c0_38, %c0_39], %80 {strides = array<i32>} : memref<4x2x8x1xf32, #tpu.memory_space<vmem>>, vector<1x2x8x1xf32>,
    %cst_40 = arith.constant dense<0.000000e+00> : vector<2x512xf32>
    %81 = tpu.matmul %74, %6, %cst_40 {dimension_numbers = #tpu.dot_dimension_numbers<[1], [0], [0], [1], [0, 0, 1, 1], [], []>} : vector<2x128xf32>, vector<128x512xf32>, vector<2x512xf32> -> vector<2x512xf32>
    %82 = vector.broadcast %7 : vector<1x512xf32> to vector<2x512xf32>
    %83 = arith.addf %81, %82 : vector<2x512xf32>
    %84 = vector.extract_strided_slice %83 {offsets = [0, 0], sizes = [2, 128], strides = [1, 1]} : vector<2x512xf32> to vector<2x128xf32>
    %85 = vector.extract_strided_slice %83 {offsets = [0, 128], sizes = [2, 128], strides = [1, 1]} : vector<2x512xf32> to vector<2x128xf32>
    %86 = vector.extract_strided_slice %83 {offsets = [0, 256], sizes = [2, 128], strides = [1, 1]} : vector<2x512xf32> to vector<2x128xf32>
    %87 = vector.extract_strided_slice %83 {offsets = [0, 384], sizes = [2, 128], strides = [1, 1]} : vector<2x512xf32> to vector<2x128xf32>
    %88 = vector.shape_cast %84 : vector<2x128xf32> to vector<2x1x128xf32>
    %89 = vector.broadcast %88 : vector<2x1x128xf32> to vector<2x8x128xf32>
    %90 = arith.addf %4, %89 : vector<2x8x128xf32>
    %91 = math.tanh %90 : vector<2x8x128xf32>
    %92 = vector.broadcast %5 : vector<1x1x128xf32> to vector<2x8x128xf32>
    %93 = arith.mulf %91, %92 : vector<2x8x128xf32>
    %cst_41 = arith.constant dense<0.000000e+00> : vector<2x8xf32>
    %94 = vector.multi_reduction <add>, %93, %cst_41 [2] : vector<2x8x128xf32> to vector<2x8xf32>
    %95 = vector.shape_cast %94 : vector<2x8xf32> to vector<2x8x1xf32>
    %cst_42 = arith.constant dense<0xFF800000> : vector<2x1xf32>
    %96 = vector.multi_reduction <maximumf>, %95, %cst_42 [1] : vector<2x8x1xf32> to vector<2x1xf32>
    %97 = vector.shape_cast %96 : vector<2x1xf32> to vector<2x1x1xf32>
    %98 = vector.broadcast %97 : vector<2x1x1xf32> to vector<2x8x1xf32>
    %99 = arith.subf %95, %98 : vector<2x8x1xf32>
    %100 = math.exp %99 : vector<2x8x1xf32>
    %cst_43 = arith.constant dense<0.000000e+00> : vector<2x1xf32>
    %101 = vector.multi_reduction <add>, %100, %cst_43 [1] : vector<2x8x1xf32> to vector<2x1xf32>
    %102 = vector.shape_cast %101 : vector<2x1xf32> to vector<2x1x1xf32>
    %103 = tpu.reciprocal %102 {approx = true} : vector<2x1x1xf32> -> vector<2x1x1xf32>
    %104 = vector.broadcast %103 : vector<2x1x1xf32> to vector<2x8x1xf32>
    %105 = arith.mulf %100, %104 : vector<2x8x1xf32>
    %106 = vector.broadcast %105 : vector<2x8x1xf32> to vector<2x8x96xf32>
    %107 = arith.mulf %106, %0 : vector<2x8x96xf32>
    %cst_44 = arith.constant dense<0.000000e+00> : vector<2x96xf32>
    %108 = vector.multi_reduction <add>, %107, %cst_44 [1] : vector<2x8x96xf32> to vector<2x96xf32>
    %c1_45 = arith.constant 1 : index
    %c0_46 = arith.constant 0 : index
    %109 = memref.load %arg0[%c1_45, %c0_46] : memref<4x2xi32, #tpu.memory_space<smem>>
    %110 = arith.index_cast %109 : i32 to index
    %c0_47 = arith.constant 0 : index
    %c0_48 = arith.constant 0 : index
    %111 = vector.load %arg9[%110, %c0_47, %c0_48] : memref<38x1x384xf32, #tpu.memory_space<vmem>>, vector<1x1x384xf32>
    %112 = vector.shape_cast %111 : vector<1x1x384xf32> to vector<1x384xf32>
    %c1_49 = arith.constant 1 : index
    %c1_50 = arith.constant 1 : index
    %113 = memref.load %arg0[%c1_49, %c1_50] : memref<4x2xi32, #tpu.memory_space<smem>>
    %114 = arith.index_cast %113 : i32 to index
    %c0_51 = arith.constant 0 : index
    %c0_52 = arith.constant 0 : index
    %115 = vector.load %arg9[%114, %c0_51, %c0_52] : memref<38x1x384xf32, #tpu.memory_space<vmem>>, vector<1x1x384xf32>
    %116 = vector.shape_cast %115 : vector<1x1x384xf32> to vector<1x384xf32>
    %117 = tpu.concatenate %112, %116 in 0 : vector<1x384xf32>, vector<1x384xf32> -> vector<2x384xf32>
    %cst_53 = arith.constant dense<0.000000e+00> : vector<2x384xf32>
    %118 = tpu.matmul %108, %8, %cst_53 {dimension_numbers = #tpu.dot_dimension_numbers<[1], [0], [0], [1], [0, 0, 1, 1], [], []>} : vector<2x96xf32>, vector<96x384xf32>, vector<2x384xf32> -> vector<2x384xf32>
    %119 = arith.addf %118, %117 : vector<2x384xf32>
    %120 = vector.broadcast %9 : vector<1x384xf32> to vector<2x384xf32>
    %121 = arith.addf %119, %120 : vector<2x384xf32>
    %122 = vector.extract_strided_slice %121 {offsets = [0, 0], sizes = [2, 128], strides = [1, 1]} : vector<2x384xf32> to vector<2x128xf32>
    %123 = vector.extract_strided_slice %121 {offsets = [0, 128], sizes = [2, 128], strides = [1, 1]} : vector<2x384xf32> to vector<2x128xf32>
    %124 = vector.extract_strided_slice %121 {offsets = [0, 256], sizes = [2, 128], strides = [1, 1]} : vector<2x384xf32> to vector<2x128xf32>
    %125 = arith.addf %122, %85 : vector<2x128xf32>
    %126 = arith.negf %125 : vector<2x128xf32>
    %127 = math.exp %126 : vector<2x128xf32>
    %cst_54 = arith.constant 1.000000e+00 : f32
    %128 = vector.broadcast %cst_54 : f32 to vector<2x128xf32>
    %129 = arith.addf %128, %127 : vector<2x128xf32>
    %130 = arith.divf %128, %129 : vector<2x128xf32>
    %131 = arith.addf %123, %86 : vector<2x128xf32>
    %132 = arith.negf %131 : vector<2x128xf32>
    %133 = math.exp %132 : vector<2x128xf32>
    %cst_55 = arith.constant 1.000000e+00 : f32
    %134 = vector.broadcast %cst_55 : f32 to vector<2x128xf32>
    %135 = arith.addf %134, %133 : vector<2x128xf32>
    %136 = arith.divf %134, %135 : vector<2x128xf32>
    %137 = arith.mulf %130, %87 : vector<2x128xf32>
    %138 = arith.addf %124, %137 : vector<2x128xf32>
    %139 = math.tanh %138 : vector<2x128xf32>
    %cst_56 = arith.constant 1.000000e+00 : f32
    %140 = vector.broadcast %cst_56 : f32 to vector<2x128xf32>
    %141 = arith.subf %140, %136 : vector<2x128xf32>
    %142 = arith.mulf %141, %139 : vector<2x128xf32>
    %143 = arith.mulf %136, %74 : vector<2x128xf32>
    %144 = arith.addf %142, %143 : vector<2x128xf32>
    %c1_57 = arith.constant 1 : index
    %c0_58 = arith.constant 0 : index
    %c0_59 = arith.constant 0 : index
    %145 = vector.load %arg10[%c1_57, %c0_58, %c0_59] : memref<4x2x128xf32, #tpu.memory_space<vmem>>, vector<1x2x128xf32>
    %146 = vector.shape_cast %145 : vector<1x2x128xf32> to vector<2x128xf32>
    %147 = vector.shape_cast %144 : vector<2x128xf32> to vector<1x2x128xf32>
    tpu.vector_store %arg10[%c1_57, %c0_58, %c0_59], %147 {strides = array<i32>} : memref<4x2x128xf32, #tpu.memory_space<vmem>>, vector<1x2x128xf32>,
    %c1_60 = arith.constant 1 : index
    %c0_61 = arith.constant 0 : index
    %c0_62 = arith.constant 0 : index
    %c0_63 = arith.constant 0 : index
    %148 = vector.load %arg11[%c1_60, %c0_61, %c0_62, %c0_63] : memref<4x2x8x1xf32, #tpu.memory_space<vmem>>, vector<1x2x8x1xf32>
    %149 = vector.shape_cast %148 : vector<1x2x8x1xf32> to vector<2x8x1xf32>
    %150 = vector.shape_cast %105 : vector<2x8x1xf32> to vector<1x2x8x1xf32>
    tpu.vector_store %arg11[%c1_60, %c0_61, %c0_62, %c0_63], %150 {strides = array<i32>} : memref<4x2x8x1xf32, #tpu.memory_space<vmem>>, vector<1x2x8x1xf32>,
    %cst_64 = arith.constant dense<0.000000e+00> : vector<2x512xf32>
    %151 = tpu.matmul %144, %6, %cst_64 {dimension_numbers = #tpu.dot_dimension_numbers<[1], [0], [0], [1], [0, 0, 1, 1], [], []>} : vector<2x128xf32>, vector<128x512xf32>, vector<2x512xf32> -> vector<2x512xf32>
    %152 = vector.broadcast %7 : vector<1x512xf32> to vector<2x512xf32>
    %153 = arith.addf %151, %152 : vector<2x512xf32>
    %154 = vector.extract_strided_slice %153 {offsets = [0, 0], sizes = [2, 128], strides = [1, 1]} : vector<2x512xf32> to vector<2x128xf32>
    %155 = vector.extract_strided_slice %153 {offsets = [0, 128], sizes = [2, 128], strides = [1, 1]} : vector<2x512xf32> to vector<2x128xf32>
    %156 = vector.extract_strided_slice %153 {offsets = [0, 256], sizes = [2, 128], strides = [1, 1]} : vector<2x512xf32> to vector<2x128xf32>
    %157 = vector.extract_strided_slice %153 {offsets = [0, 384], sizes = [2, 128], strides = [1, 1]} : vector<2x512xf32> to vector<2x128xf32>
    %158 = vector.shape_cast %154 : vector<2x128xf32> to vector<2x1x128xf32>
    %159 = vector.broadcast %158 : vector<2x1x128xf32> to vector<2x8x128xf32>
    %160 = arith.addf %4, %159 : vector<2x8x128xf32>
    %161 = math.tanh %160 : vector<2x8x128xf32>
    %162 = vector.broadcast %5 : vector<1x1x128xf32> to vector<2x8x128xf32>
    %163 = arith.mulf %161, %162 : vector<2x8x128xf32>
    %cst_65 = arith.constant dense<0.000000e+00> : vector<2x8xf32>
    %164 = vector.multi_reduction <add>, %163, %cst_65 [2] : vector<2x8x128xf32> to vector<2x8xf32>
    %165 = vector.shape_cast %164 : vector<2x8xf32> to vector<2x8x1xf32>
    %cst_66 = arith.constant dense<0xFF800000> : vector<2x1xf32>
    %166 = vector.multi_reduction <maximumf>, %165, %cst_66 [1] : vector<2x8x1xf32> to vector<2x1xf32>
    %167 = vector.shape_cast %166 : vector<2x1xf32> to vector<2x1x1xf32>
    %168 = vector.broadcast %167 : vector<2x1x1xf32> to vector<2x8x1xf32>
    %169 = arith.subf %165, %168 : vector<2x8x1xf32>
    %170 = math.exp %169 : vector<2x8x1xf32>
    %cst_67 = arith.constant dense<0.000000e+00> : vector<2x1xf32>
    %171 = vector.multi_reduction <add>, %170, %cst_67 [1] : vector<2x8x1xf32> to vector<2x1xf32>
    %172 = vector.shape_cast %171 : vector<2x1xf32> to vector<2x1x1xf32>
    %173 = tpu.reciprocal %172 {approx = true} : vector<2x1x1xf32> -> vector<2x1x1xf32>
    %174 = vector.broadcast %173 : vector<2x1x1xf32> to vector<2x8x1xf32>
    %175 = arith.mulf %170, %174 : vector<2x8x1xf32>
    %176 = vector.broadcast %175 : vector<2x8x1xf32> to vector<2x8x96xf32>
    %177 = arith.mulf %176, %0 : vector<2x8x96xf32>
    %cst_68 = arith.constant dense<0.000000e+00> : vector<2x96xf32>
    %178 = vector.multi_reduction <add>, %177, %cst_68 [1] : vector<2x8x96xf32> to vector<2x96xf32>
    %c2 = arith.constant 2 : index
    %c0_69 = arith.constant 0 : index
    %179 = memref.load %arg0[%c2, %c0_69] : memref<4x2xi32, #tpu.memory_space<smem>>
    %180 = arith.index_cast %179 : i32 to index
    %c0_70 = arith.constant 0 : index
    %c0_71 = arith.constant 0 : index
    %181 = vector.load %arg9[%180, %c0_70, %c0_71] : memref<38x1x384xf32, #tpu.memory_space<vmem>>, vector<1x1x384xf32>
    %182 = vector.shape_cast %181 : vector<1x1x384xf32> to vector<1x384xf32>
    %c2_72 = arith.constant 2 : index
    %c1_73 = arith.constant 1 : index
    %183 = memref.load %arg0[%c2_72, %c1_73] : memref<4x2xi32, #tpu.memory_space<smem>>
    %184 = arith.index_cast %183 : i32 to index
    %c0_74 = arith.constant 0 : index
    %c0_75 = arith.constant 0 : index
    %185 = vector.load %arg9[%184, %c0_74, %c0_75] : memref<38x1x384xf32, #tpu.memory_space<vmem>>, vector<1x1x384xf32>
    %186 = vector.shape_cast %185 : vector<1x1x384xf32> to vector<1x384xf32>
    %187 = tpu.concatenate %182, %186 in 0 : vector<1x384xf32>, vector<1x384xf32> -> vector<2x384xf32>
    %cst_76 = arith.constant dense<0.000000e+00> : vector<2x384xf32>
    %188 = tpu.matmul %178, %8, %cst_76 {dimension_numbers = #tpu.dot_dimension_numbers<[1], [0], [0], [1], [0, 0, 1, 1], [], []>} : vector<2x96xf32>, vector<96x384xf32>, vector<2x384xf32> -> vector<2x384xf32>
    %189 = arith.addf %188, %187 : vector<2x384xf32>
    %190 = vector.broadcast %9 : vector<1x384xf32> to vector<2x384xf32>
    %191 = arith.addf %189, %190 : vector<2x384xf32>
    %192 = vector.extract_strided_slice %191 {offsets = [0, 0], sizes = [2, 128], strides = [1, 1]} : vector<2x384xf32> to vector<2x128xf32>
    %193 = vector.extract_strided_slice %191 {offsets = [0, 128], sizes = [2, 128], strides = [1, 1]} : vector<2x384xf32> to vector<2x128xf32>
    %194 = vector.extract_strided_slice %191 {offsets = [0, 256], sizes = [2, 128], strides = [1, 1]} : vector<2x384xf32> to vector<2x128xf32>
    %195 = arith.addf %192, %155 : vector<2x128xf32>
    %196 = arith.negf %195 : vector<2x128xf32>
    %197 = math.exp %196 : vector<2x128xf32>
    %cst_77 = arith.constant 1.000000e+00 : f32
    %198 = vector.broadcast %cst_77 : f32 to vector<2x128xf32>
    %199 = arith.addf %198, %197 : vector<2x128xf32>
    %200 = arith.divf %198, %199 : vector<2x128xf32>
    %201 = arith.addf %193, %156 : vector<2x128xf32>
    %202 = arith.negf %201 : vector<2x128xf32>
    %203 = math.exp %202 : vector<2x128xf32>
    %cst_78 = arith.constant 1.000000e+00 : f32
    %204 = vector.broadcast %cst_78 : f32 to vector<2x128xf32>
    %205 = arith.addf %204, %203 : vector<2x128xf32>
    %206 = arith.divf %204, %205 : vector<2x128xf32>
    %207 = arith.mulf %200, %157 : vector<2x128xf32>
    %208 = arith.addf %194, %207 : vector<2x128xf32>
    %209 = math.tanh %208 : vector<2x128xf32>
    %cst_79 = arith.constant 1.000000e+00 : f32
    %210 = vector.broadcast %cst_79 : f32 to vector<2x128xf32>
    %211 = arith.subf %210, %206 : vector<2x128xf32>
    %212 = arith.mulf %211, %209 : vector<2x128xf32>
    %213 = arith.mulf %206, %144 : vector<2x128xf32>
    %214 = arith.addf %212, %213 : vector<2x128xf32>
    %c2_80 = arith.constant 2 : index
    %c0_81 = arith.constant 0 : index
    %c0_82 = arith.constant 0 : index
    %215 = vector.load %arg10[%c2_80, %c0_81, %c0_82] : memref<4x2x128xf32, #tpu.memory_space<vmem>>, vector<1x2x128xf32>
    %216 = vector.shape_cast %215 : vector<1x2x128xf32> to vector<2x128xf32>
    %217 = vector.shape_cast %214 : vector<2x128xf32> to vector<1x2x128xf32>
    tpu.vector_store %arg10[%c2_80, %c0_81, %c0_82], %217 {strides = array<i32>} : memref<4x2x128xf32, #tpu.memory_space<vmem>>, vector<1x2x128xf32>,
    %c2_83 = arith.constant 2 : index
    %c0_84 = arith.constant 0 : index
    %c0_85 = arith.constant 0 : index
    %c0_86 = arith.constant 0 : index
    %218 = vector.load %arg11[%c2_83, %c0_84, %c0_85, %c0_86] : memref<4x2x8x1xf32, #tpu.memory_space<vmem>>, vector<1x2x8x1xf32>
    %219 = vector.shape_cast %218 : vector<1x2x8x1xf32> to vector<2x8x1xf32>
    %220 = vector.shape_cast %175 : vector<2x8x1xf32> to vector<1x2x8x1xf32>
    tpu.vector_store %arg11[%c2_83, %c0_84, %c0_85, %c0_86], %220 {strides = array<i32>} : memref<4x2x8x1xf32, #tpu.memory_space<vmem>>, vector<1x2x8x1xf32>,
    %cst_87 = arith.constant dense<0.000000e+00> : vector<2x512xf32>
    %221 = tpu.matmul %214, %6, %cst_87 {dimension_numbers = #tpu.dot_dimension_numbers<[1], [0], [0], [1], [0, 0, 1, 1], [], []>} : vector<2x128xf32>, vector<128x512xf32>, vector<2x512xf32> -> vector<2x512xf32>
    %222 = vector.broadcast %7 : vector<1x512xf32> to vector<2x512xf32>
    %223 = arith.addf %221, %222 : vector<2x512xf32>
    %224 = vector.extract_strided_slice %223 {offsets = [0, 0], sizes = [2, 128], strides = [1, 1]} : vector<2x512xf32> to vector<2x128xf32>
    %225 = vector.extract_strided_slice %223 {offsets = [0, 128], sizes = [2, 128], strides = [1, 1]} : vector<2x512xf32> to vector<2x128xf32>
    %226 = vector.extract_strided_slice %223 {offsets = [0, 256], sizes = [2, 128], strides = [1, 1]} : vector<2x512xf32> to vector<2x128xf32>
    %227 = vector.extract_strided_slice %223 {offsets = [0, 384], sizes = [2, 128], strides = [1, 1]} : vector<2x512xf32> to vector<2x128xf32>
    %228 = vector.shape_cast %224 : vector<2x128xf32> to vector<2x1x128xf32>
    %229 = vector.broadcast %228 : vector<2x1x128xf32> to vector<2x8x128xf32>
    %230 = arith.addf %4, %229 : vector<2x8x128xf32>
    %231 = math.tanh %230 : vector<2x8x128xf32>
    %232 = vector.broadcast %5 : vector<1x1x128xf32> to vector<2x8x128xf32>
    %233 = arith.mulf %231, %232 : vector<2x8x128xf32>
    %cst_88 = arith.constant dense<0.000000e+00> : vector<2x8xf32>
    %234 = vector.multi_reduction <add>, %233, %cst_88 [2] : vector<2x8x128xf32> to vector<2x8xf32>
    %235 = vector.shape_cast %234 : vector<2x8xf32> to vector<2x8x1xf32>
    %cst_89 = arith.constant dense<0xFF800000> : vector<2x1xf32>
    %236 = vector.multi_reduction <maximumf>, %235, %cst_89 [1] : vector<2x8x1xf32> to vector<2x1xf32>
    %237 = vector.shape_cast %236 : vector<2x1xf32> to vector<2x1x1xf32>
    %238 = vector.broadcast %237 : vector<2x1x1xf32> to vector<2x8x1xf32>
    %239 = arith.subf %235, %238 : vector<2x8x1xf32>
    %240 = math.exp %239 : vector<2x8x1xf32>
    %cst_90 = arith.constant dense<0.000000e+00> : vector<2x1xf32>
    %241 = vector.multi_reduction <add>, %240, %cst_90 [1] : vector<2x8x1xf32> to vector<2x1xf32>
    %242 = vector.shape_cast %241 : vector<2x1xf32> to vector<2x1x1xf32>
    %243 = tpu.reciprocal %242 {approx = true} : vector<2x1x1xf32> -> vector<2x1x1xf32>
    %244 = vector.broadcast %243 : vector<2x1x1xf32> to vector<2x8x1xf32>
    %245 = arith.mulf %240, %244 : vector<2x8x1xf32>
    %246 = vector.broadcast %245 : vector<2x8x1xf32> to vector<2x8x96xf32>
    %247 = arith.mulf %246, %0 : vector<2x8x96xf32>
    %cst_91 = arith.constant dense<0.000000e+00> : vector<2x96xf32>
    %248 = vector.multi_reduction <add>, %247, %cst_91 [1] : vector<2x8x96xf32> to vector<2x96xf32>
    %c3 = arith.constant 3 : index
    %c0_92 = arith.constant 0 : index
    %249 = memref.load %arg0[%c3, %c0_92] : memref<4x2xi32, #tpu.memory_space<smem>>
    %250 = arith.index_cast %249 : i32 to index
    %c0_93 = arith.constant 0 : index
    %c0_94 = arith.constant 0 : index
    %251 = vector.load %arg9[%250, %c0_93, %c0_94] : memref<38x1x384xf32, #tpu.memory_space<vmem>>, vector<1x1x384xf32>
    %252 = vector.shape_cast %251 : vector<1x1x384xf32> to vector<1x384xf32>
    %c3_95 = arith.constant 3 : index
    %c1_96 = arith.constant 1 : index
    %253 = memref.load %arg0[%c3_95, %c1_96] : memref<4x2xi32, #tpu.memory_space<smem>>
    %254 = arith.index_cast %253 : i32 to index
    %c0_97 = arith.constant 0 : index
    %c0_98 = arith.constant 0 : index
    %255 = vector.load %arg9[%254, %c0_97, %c0_98] : memref<38x1x384xf32, #tpu.memory_space<vmem>>, vector<1x1x384xf32>
    %256 = vector.shape_cast %255 : vector<1x1x384xf32> to vector<1x384xf32>
    %257 = tpu.concatenate %252, %256 in 0 : vector<1x384xf32>, vector<1x384xf32> -> vector<2x384xf32>
    %cst_99 = arith.constant dense<0.000000e+00> : vector<2x384xf32>
    %258 = tpu.matmul %248, %8, %cst_99 {dimension_numbers = #tpu.dot_dimension_numbers<[1], [0], [0], [1], [0, 0, 1, 1], [], []>} : vector<2x96xf32>, vector<96x384xf32>, vector<2x384xf32> -> vector<2x384xf32>
    %259 = arith.addf %258, %257 : vector<2x384xf32>
    %260 = vector.broadcast %9 : vector<1x384xf32> to vector<2x384xf32>
    %261 = arith.addf %259, %260 : vector<2x384xf32>
    %262 = vector.extract_strided_slice %261 {offsets = [0, 0], sizes = [2, 128], strides = [1, 1]} : vector<2x384xf32> to vector<2x128xf32>
    %263 = vector.extract_strided_slice %261 {offsets = [0, 128], sizes = [2, 128], strides = [1, 1]} : vector<2x384xf32> to vector<2x128xf32>
    %264 = vector.extract_strided_slice %261 {offsets = [0, 256], sizes = [2, 128], strides = [1, 1]} : vector<2x384xf32> to vector<2x128xf32>
    %265 = arith.addf %262, %225 : vector<2x128xf32>
    %266 = arith.negf %265 : vector<2x128xf32>
    %267 = math.exp %266 : vector<2x128xf32>
    %cst_100 = arith.constant 1.000000e+00 : f32
    %268 = vector.broadcast %cst_100 : f32 to vector<2x128xf32>
    %269 = arith.addf %268, %267 : vector<2x128xf32>
    %270 = arith.divf %268, %269 : vector<2x128xf32>
    %271 = arith.addf %263, %226 : vector<2x128xf32>
    %272 = arith.negf %271 : vector<2x128xf32>
    %273 = math.exp %272 : vector<2x128xf32>
    %cst_101 = arith.constant 1.000000e+00 : f32
    %274 = vector.broadcast %cst_101 : f32 to vector<2x128xf32>
    %275 = arith.addf %274, %273 : vector<2x128xf32>
    %276 = arith.divf %274, %275 : vector<2x128xf32>
    %277 = arith.mulf %270, %227 : vector<2x128xf32>
    %278 = arith.addf %264, %277 : vector<2x128xf32>
    %279 = math.tanh %278 : vector<2x128xf32>
    %cst_102 = arith.constant 1.000000e+00 : f32
    %280 = vector.broadcast %cst_102 : f32 to vector<2x128xf32>
    %281 = arith.subf %280, %276 : vector<2x128xf32>
    %282 = arith.mulf %281, %279 : vector<2x128xf32>
    %283 = arith.mulf %276, %214 : vector<2x128xf32>
    %284 = arith.addf %282, %283 : vector<2x128xf32>
    %c3_103 = arith.constant 3 : index
    %c0_104 = arith.constant 0 : index
    %c0_105 = arith.constant 0 : index
    %285 = vector.load %arg10[%c3_103, %c0_104, %c0_105] : memref<4x2x128xf32, #tpu.memory_space<vmem>>, vector<1x2x128xf32>
    %286 = vector.shape_cast %285 : vector<1x2x128xf32> to vector<2x128xf32>
    %287 = vector.shape_cast %284 : vector<2x128xf32> to vector<1x2x128xf32>
    tpu.vector_store %arg10[%c3_103, %c0_104, %c0_105], %287 {strides = array<i32>} : memref<4x2x128xf32, #tpu.memory_space<vmem>>, vector<1x2x128xf32>,
    %c3_106 = arith.constant 3 : index
    %c0_107 = arith.constant 0 : index
    %c0_108 = arith.constant 0 : index
    %c0_109 = arith.constant 0 : index
    %288 = vector.load %arg11[%c3_106, %c0_107, %c0_108, %c0_109] : memref<4x2x8x1xf32, #tpu.memory_space<vmem>>, vector<1x2x8x1xf32>
    %289 = vector.shape_cast %288 : vector<1x2x8x1xf32> to vector<2x8x1xf32>
    %290 = vector.shape_cast %245 : vector<2x8x1xf32> to vector<1x2x8x1xf32>
    tpu.vector_store %arg11[%c3_106, %c0_107, %c0_108, %c0_109], %290 {strides = array<i32>} : memref<4x2x8x1xf32, #tpu.memory_space<vmem>>, vector<1x2x8x1xf32>,
    return
  }
}

</mosaic_0001>

<llo_original>
// kernel: tpu_custom_call.1
$region0: #{tpu_custom_call.1}
  #allocation0 [shape = 'u32[]', space=smem, size = 0x4, offset = 0x4, fixed_abs, tag = 'smem constant byte address 0x4 - core index']
  #allocation1 [shape = 'u32[72,128]{1,0:T(1,128)}', space=vmem, size = 0x9000, scoped, tag = 'internal scratch']
  %s0 = inlined_call_operand.vmem [shape: s32[4,2], index: 0, kind: input, shape index: {}]
  %s1 = inlined_call_operand.hbm [shape: f32[2,128], index: 1, kind: input, shape index: {}]
  %s2 = inlined_call_operand.hbm [shape: f32[2,8,96], index: 2, kind: input, shape index: {}]
  %s3 = inlined_call_operand.hbm [shape: f32[96,128], index: 3, kind: input, shape index: {}]
  %s4 = inlined_call_operand.vmem [shape: f32[1,1,128], index: 4, kind: input, shape index: {}]
  %s5 = inlined_call_operand.hbm [shape: f32[128,512], index: 5, kind: input, shape index: {}]
  %s6 = inlined_call_operand.vmem [shape: f32[1,512], index: 6, kind: input, shape index: {}]
  %s7 = inlined_call_operand.hbm [shape: f32[96,384], index: 7, kind: input, shape index: {}]
  %s8 = inlined_call_operand.vmem [shape: f32[1,384], index: 8, kind: input, shape index: {}]
  %s9 = inlined_call_operand.hbm [shape: f32[38,1,384], index: 9, kind: input, shape index: {}]
  %s10 = inlined_call_operand.hbm [shape: f32[4,2,128], index: 10, kind: output, shape index: {0}]
  %s11 = inlined_call_operand.vmem [shape: f32[4,2,8,1], index: 11, kind: output, shape index: {1}]
  %12 = xla_tuple %s10, %s11
  %s13 = sld [smem:[#allocation0]]
  $region86: #{tpu_custom_call.1} parent=0
    _
  %s15 = ssub.s32 1, %s13
  %s16 = scalar_select 0, %s15, %s13
  $region1: #{tpu_custom_call.1} parent=0
    #allocation2 [shape = 'u8[2048]{0}', space=smem, size = 0x800, scoped, tag = 'input window, operand 0, single buffered']
    #allocation3 [shape = 's32[1]{0}', space=sflag, size = 0x4, scoped, tag = 'scoped memory for tpu_custom_call.1']
    #allocation4 [shape = 's32[1]{0}', space=sflag, size = 0x4, scoped, tag = 'scoped memory for tpu_custom_call.1']
    #allocation5 [shape = 's32[1]{0}', space=sflag, size = 0x4, scoped, tag = 'scoped memory for tpu_custom_call.1']
    #allocation6 [shape = 'u8[1024]{0}', space=vmem, size = 0x400, scoped, tag = 'input window, operand 1, single buffered']
    #allocation7 [shape = 'u8[8192]{0}', space=vmem, size = 0x2000, scoped, tag = 'input window, operand 2, single buffered']
    #allocation8 [shape = 's32[1]{0}', space=sflag, size = 0x4, scoped, tag = 'scoped memory for tpu_custom_call.1']
    #allocation9 [shape = 'u8[49152]{0}', space=vmem, size = 0xc000, scoped, tag = 'input window, operand 3, single buffered']
    #allocation10 [shape = 'u8[262144]{0}', space=vmem, size = 0x40000, scoped, tag = 'input window, operand 5, single buffered']
    #allocation11 [shape = 's32[1]{0}', space=sflag, size = 0x4, scoped, tag = 'scoped memory for tpu_custom_call.1']
    #allocation12 [shape = 'u8[147456]{0}', space=vmem, size = 0x24000, scoped, tag = 'input window, operand 7, single buffered']
    #allocation13 [shape = 'u8[58368]{0}', space=vmem, size = 0xe400, scoped, tag = 'input window, operand 9, single buffered']
    #allocation14 [shape = 's32[1]{0}', space=sflag, size = 0x4, scoped, tag = 'scoped memory for tpu_custom_call.1']
    #allocation15 [shape = 'u8[4096]{0}', space=vmem, size = 0x1000, scoped, tag = 'output window, operand 0, single buffered']
    %17 = vsyncpa [#allocation5], 0
    %18 = vsyncpa [#allocation3], 0
    %19 = vsyncpa [#allocation8], 0
    %20 = vsyncpa [#allocation11], 0
    %21 = vsyncpa [#allocation14], 0
    %22 = vsyncpa [#allocation4], 0
    // Predicated region
    $region2: #{tpu_custom_call.1} parent=1 // pred_check
      _
    $region3: #{tpu_custom_call.1} parent=1 // pred_check_branch
      %24 = sbr.rel (0) target = $region5
    $region4: #{tpu_custom_call.1} parent=1 // pred_region
      %26 = vsyncadd [#allocation5], 0
      %s28 = sshll.u32 %s0, 4
      %s29 = int_to_ptr.vmem [resolvable:$true] %s28
      %31 = dma.vmem_to_smem %s29, 64, [#allocation2], [#allocation5]
    $region5: #{tpu_custom_call.1} parent=1 // pred_fallthru
      _
    // Predicated region
    $region6: #{tpu_custom_call.1} parent=1 // pred_check
      _
    $region7: #{tpu_custom_call.1} parent=1 // pred_check_branch
      %33 = sbr.rel (0) target = $region9
    $region8: #{tpu_custom_call.1} parent=1 // pred_region
      %35 = vsyncadd [#allocation3], 0
      %s37 = sshll.u32 %s1, 4
      %s38 = int_to_ptr.hbm [resolvable:$true] %s37
      %s39 = sshll.u32 [#allocation6], 4
      %s40 = int_to_ptr.vmem [resolvable:$true] %s39
      %42 = dma.hbm_to_vmem [thread:$0]  %s38, 32, %s40, [#allocation3]
    $region9: #{tpu_custom_call.1} parent=1 // pred_fallthru
      _
    // Predicated region
    $region10: #{tpu_custom_call.1} parent=1 // pred_check
      _
    $region11: #{tpu_custom_call.1} parent=1 // pred_check_branch
      %44 = sbr.rel (0) target = $region13
    $region12: #{tpu_custom_call.1} parent=1 // pred_region
      %46 = vsyncadd [#allocation8], 0
      %s47 = sshll.u32 %s2, 4
      %s48 = int_to_ptr.hbm [resolvable:$true] %s47
      %s49 = sshll.u32 [#allocation7], 4
      %s50 = int_to_ptr.vmem [resolvable:$true] %s49
      %55 = dma.hbm_to_vmem [thread:$0]  %s48, 256, %s50, [#allocation8], 128, 128, 8
    $region13: #{tpu_custom_call.1} parent=1 // pred_fallthru
      _
    // Predicated region
    $region14: #{tpu_custom_call.1} parent=1 // pred_check
      _
    $region15: #{tpu_custom_call.1} parent=1 // pred_check_branch
      %57 = sbr.rel (0) target = $region17
    $region16: #{tpu_custom_call.1} parent=1 // pred_region
      %59 = vsyncadd [#allocation8], 0
      %s60 = sshll.u32 %s3, 4
      %s61 = int_to_ptr.hbm [resolvable:$true] %s60
      %s62 = sshll.u32 [#allocation9], 4
      %s63 = int_to_ptr.vmem [resolvable:$true] %s62
      %68 = dma.hbm_to_vmem [thread:$0]  %s61, 1536, %s63, [#allocation8], 128, 128, 8
    $region17: #{tpu_custom_call.1} parent=1 // pred_fallthru
      _
    // Predicated region
    $region18: #{tpu_custom_call.1} parent=1 // pred_check
      _
    $region19: #{tpu_custom_call.1} parent=1 // pred_check_branch
      %70 = sbr.rel (0) target = $region21
    $region20: #{tpu_custom_call.1} parent=1 // pred_region
      _
    $region21: #{tpu_custom_call.1} parent=1 // pred_fallthru
      _
    // Predicated region
    $region22: #{tpu_custom_call.1} parent=1 // pred_check
      _
    $region23: #{tpu_custom_call.1} parent=1 // pred_check_branch
      %72 = sbr.rel (0) target = $region25
    $region24: #{tpu_custom_call.1} parent=1 // pred_region
      %74 = vsyncadd [#allocation11], 0
      %s75 = sshll.u32 %s5, 4
      %s76 = int_to_ptr.hbm [resolvable:$true] %s75
      %s77 = sshll.u32 [#allocation10], 4
      %s78 = int_to_ptr.vmem [resolvable:$true] %s77
      %83 = dma.hbm_to_vmem [thread:$0]  %s76, 8192, %s78, [#allocation11], 512, 512, 32
    $region25: #{tpu_custom_call.1} parent=1 // pred_fallthru
      _
    // Predicated region
    $region26: #{tpu_custom_call.1} parent=1 // pred_check
      _
    $region27: #{tpu_custom_call.1} parent=1 // pred_check_branch
      %85 = sbr.rel (0) target = $region29
    $region28: #{tpu_custom_call.1} parent=1 // pred_region
      _
    $region29: #{tpu_custom_call.1} parent=1 // pred_fallthru
      _
    // Predicated region
    $region30: #{tpu_custom_call.1} parent=1 // pred_check
      _
    $region31: #{tpu_custom_call.1} parent=1 // pred_check_branch
      %87 = sbr.rel (0) target = $region33
    $region32: #{tpu_custom_call.1} parent=1 // pred_region
      %89 = vsyncadd [#allocation11], 0
      %s90 = sshll.u32 %s7, 4
      %s91 = int_to_ptr.hbm [resolvable:$true] %s90
      %s92 = sshll.u32 [#allocation12], 4
      %s93 = int_to_ptr.vmem [resolvable:$true] %s92
      %98 = dma.hbm_to_vmem [thread:$0]  %s91, 4608, %s93, [#allocation11], 384, 384, 24
    $region33: #{tpu_custom_call.1} parent=1 // pred_fallthru
      _
    // Predicated region
    $region34: #{tpu_custom_call.1} parent=1 // pred_check
      _
    $region35: #{tpu_custom_call.1} parent=1 // pred_check_branch
      %100 = sbr.rel (0) target = $region37
    $region36: #{tpu_custom_call.1} parent=1 // pred_region
      _
    $region37: #{tpu_custom_call.1} parent=1 // pred_fallthru
      _
    // Predicated region
    $region38: #{tpu_custom_call.1} parent=1 // pred_check
      _
    $region39: #{tpu_custom_call.1} parent=1 // pred_check_branch
      %102 = sbr.rel (0) target = $region41
    $region40: #{tpu_custom_call.1} parent=1 // pred_region
      %104 = vsyncadd [#allocation14], 0
      %s105 = sshll.u32 %s9, 4
      %s106 = int_to_ptr.hbm [resolvable:$true] %s105
      %s107 = sshll.u32 [#allocation13], 4
      %s108 = int_to_ptr.vmem [resolvable:$true] %s107
      %113 = dma.hbm_to_vmem [thread:$0]  %s106, 1824, %s108, [#allocation14], 48, 48, 3
    $region41: #{tpu_custom_call.1} parent=1 // pred_fallthru
      _
    // Predicated region
    $region42: #{tpu_custom_call.1} parent=1 // pred_check
      _
    $region43: #{tpu_custom_call.1} parent=1 // pred_check_branch
      %115 = sbr.rel (0) target = $region45
    $region44: #{tpu_custom_call.1} parent=1 // pred_region
      %117 = dma.done [#allocation5], 64
    $region45: #{tpu_custom_call.1} parent=1 // pred_fallthru
      _
    // Predicated region
    $region46: #{tpu_custom_call.1} parent=1 // pred_check
      _
    $region47: #{tpu_custom_call.1} parent=1 // pred_check_branch
      %119 = sbr.rel (0) target = $region49
    $region48: #{tpu_custom_call.1} parent=1 // pred_region
      %121 = dma.done [#allocation3], 32
    $region49: #{tpu_custom_call.1} parent=1 // pred_fallthru
      _
    // Predicated region
    $region50: #{tpu_custom_call.1} parent=1 // pred_check
      _
    $region51: #{tpu_custom_call.1} parent=1 // pred_check_branch
      %123 = sbr.rel (0) target = $region53
    $region52: #{tpu_custom_call.1} parent=1 // pred_region
      %125 = dma.done [#allocation8], 256
    $region53: #{tpu_custom_call.1} parent=1 // pred_fallthru
      _
    // Predicated region
    $region54: #{tpu_custom_call.1} parent=1 // pred_check
      _
    $region55: #{tpu_custom_call.1} parent=1 // pred_check_branch
      %127 = sbr.rel (0) target = $region57
    $region56: #{tpu_custom_call.1} parent=1 // pred_region
      %129 = dma.done [#allocation8], 1536
    $region57: #{tpu_custom_call.1} parent=1 // pred_fallthru
      _
    // Predicated region
    $region58: #{tpu_custom_call.1} parent=1 // pred_check
      _
    $region59: #{tpu_custom_call.1} parent=1 // pred_check_branch
      %131 = sbr.rel (0) target = $region61
    $region60: #{tpu_custom_call.1} parent=1 // pred_region
      %133 = dma.done [#allocation11], 8192
    $region61: #{tpu_custom_call.1} parent=1 // pred_fallthru
      _
    // Predicated region
    $region62: #{tpu_custom_call.1} parent=1 // pred_check
      _
    $region63: #{tpu_custom_call.1} parent=1 // pred_check_branch
      %135 = sbr.rel (0) target = $region65
    $region64: #{tpu_custom_call.1} parent=1 // pred_region
      %137 = dma.done [#allocation11], 4608
    $region65: #{tpu_custom_call.1} parent=1 // pred_fallthru
      _
    // Predicated region
    $region66: #{tpu_custom_call.1} parent=1 // pred_check
      _
    $region67: #{tpu_custom_call.1} parent=1 // pred_check_branch
      %139 = sbr.rel (0) target = $region69
    $region68: #{tpu_custom_call.1} parent=1 // pred_region
      %141 = dma.done [#allocation14], 1824
    $region69: #{tpu_custom_call.1} parent=1 // pred_fallthru
      _
    %142 = sfence
    %v143 = vld [vmem:[#allocation7] sm:$0xff]
    %v144 = vld [vmem:[#allocation7 + $0x8] sm:$0xff]
    %v145 = vld [vmem:[#allocation9] sm:$0xff]
    %v146 = vld [vmem:[#allocation9 + $0x8] sm:$0xff]
    %v147 = vld [vmem:[#allocation9 + $0x10] sm:$0xff]
    %v148 = vld [vmem:[#allocation9 + $0x18] sm:$0xff]
    %v149 = vld [vmem:[#allocation9 + $0x20] sm:$0xff]
    %v150 = vld [vmem:[#allocation9 + $0x28] sm:$0xff]
    %v151 = vld [vmem:[#allocation9 + $0x30] sm:$0xff]
    %v152 = vld [vmem:[#allocation9 + $0x38] sm:$0xff]
    %v153 = vld [vmem:[#allocation9 + $0x40] sm:$0xff]
    %v154 = vld [vmem:[#allocation9 + $0x48] sm:$0xff]
    %v155 = vld [vmem:[#allocation9 + $0x50] sm:$0xff]
    %v156 = vld [vmem:[#allocation9 + $0x58] sm:$0xff]
    %vm157 = vcmask 785408
    %v159 = vsel %vm157, %v143, 0
    %v162 = vsel %vm157, %v144, 0
    %164 = vmatpush.msra.mxu0 0.0
    %165 = vmatpush.msra.mxu0 0.0
    %166 = vmatpush.msra.mxu0 0.0
    %167 = vmatpush.msra.mxu0 0.0
    %168 = vmatpush.msra.mxu0 %v156
    %169 = vmatpush.msra.mxu0 %v155
    %170 = vmatpush.msra.mxu0 %v154
    %171 = vmatpush.msra.mxu0 %v153
    %172 = vmatpush.msra.mxu0 %v152
    %173 = vmatpush.msra.mxu0 %v151
    %174 = vmatpush.msra.mxu0 %v150
    %175 = vmatpush.msra.mxu0 %v149
    %176 = vmatpush.msra.mxu0 %v148
    %177 = vmatpush.msra.mxu0 %v147
    %178 = vmatpush.msra.mxu0 %v146
    %179 = vmatpush.msra.mxu0 %v145
    %180 = vmatmul.f32.gmra.mxu0 %v159
    %v181 = vpop.f32.mrf.mxu0
    %v182 = vadd.f32 0.0, %v181
    %183 = vmatmul.f32.gmra.mxu0 %v162
    %v184 = vpop.f32.mrf.mxu0
    %v185 = vadd.f32 0.0, %v184
    %186 = vdwg.mxu0
    %v187 = vld [vmem:[%s4] sm:$0x1]
    %v188 = vld [vmem:[#allocation10] sm:$0xff]
    %v189 = vld [vmem:[#allocation10 + $0x8] sm:$0xff]
    %v190 = vld [vmem:[#allocation10 + $0x10] sm:$0xff]
    %v191 = vld [vmem:[#allocation10 + $0x18] sm:$0xff]
    %v192 = vld [vmem:[#allocation10 + $0x20] sm:$0xff]
    %v193 = vld [vmem:[#allocation10 + $0x28] sm:$0xff]
    %v194 = vld [vmem:[#allocation10 + $0x30] sm:$0xff]
    %v195 = vld [vmem:[#allocation10 + $0x38] sm:$0xff]
    %v196 = vld [vmem:[#allocation10 + $0x40] sm:$0xff]
    %v197 = vld [vmem:[#allocation10 + $0x48] sm:$0xff]
    %v198 = vld [vmem:[#allocation10 + $0x50] sm:$0xff]
    %v199 = vld [vmem:[#allocation10 + $0x58] sm:$0xff]
    %v200 = vld [vmem:[#allocation10 + $0x60] sm:$0xff]
    %v201 = vld [vmem:[#allocation10 + $0x68] sm:$0xff]
    %v202 = vld [vmem:[#allocation10 + $0x70] sm:$0xff]
    %v203 = vld [vmem:[#allocation10 + $0x78] sm:$0xff]
    %v204 = vld [vmem:[#allocation10 + $0x80] sm:$0xff]
    %v205 = vld [vmem:[#allocation10 + $0x88] sm:$0xff]
    %v206 = vld [vmem:[#allocation10 + $0x90] sm:$0xff]
    %v207 = vld [vmem:[#allocation10 + $0x98] sm:$0xff]
    %v208 = vld [vmem:[#allocation10 + $0xa0] sm:$0xff]
    %v209 = vld [vmem:[#allocation10 + $0xa8] sm:$0xff]
    %v210 = vld [vmem:[#allocation10 + $0xb0] sm:$0xff]
    %v211 = vld [vmem:[#allocation10 + $0xb8] sm:$0xff]
    %v212 = vld [vmem:[#allocation10 + $0xc0] sm:$0xff]
    %v213 = vld [vmem:[#allocation10 + $0xc8] sm:$0xff]
    %v214 = vld [vmem:[#allocation10 + $0xd0] sm:$0xff]
    %v215 = vld [vmem:[#allocation10 + $0xd8] sm:$0xff]
    %v216 = vld [vmem:[#allocation10 + $0xe0] sm:$0xff]
    %v217 = vld [vmem:[#allocation10 + $0xe8] sm:$0xff]
    %v218 = vld [vmem:[#allocation10 + $0xf0] sm:$0xff]
    %v219 = vld [vmem:[#allocation10 + $0xf8] sm:$0xff]
    %v220 = vld [vmem:[#allocation10 + $0x100] sm:$0xff]
    %v221 = vld [vmem:[#allocation10 + $0x108] sm:$0xff]
    %v222 = vld [vmem:[#allocation10 + $0x110] sm:$0xff]
    %v223 = vld [vmem:[#allocation10 + $0x118] sm:$0xff]
    %v224 = vld [vmem:[#allocation10 + $0x120] sm:$0xff]
    %v225 = vld [vmem:[#allocation10 + $0x128] sm:$0xff]
    %v226 = vld [vmem:[#allocation10 + $0x130] sm:$0xff]
    %v227 = vld [vmem:[#allocation10 + $0x138] sm:$0xff]
    %v228 = vld [vmem:[#allocation10 + $0x140] sm:$0xff]
    %v229 = vld [vmem:[#allocation10 + $0x148] sm:$0xff]
    %v230 = vld [vmem:[#allocation10 + $0x150] sm:$0xff]
    %v231 = vld [vmem:[#allocation10 + $0x158] sm:$0xff]
    %v232 = vld [vmem:[#allocation10 + $0x160] sm:$0xff]
    %v233 = vld [vmem:[#allocation10 + $0x168] sm:$0xff]
    %v234 = vld [vmem:[#allocation10 + $0x170] sm:$0xff]
    %v235 = vld [vmem:[#allocation10 + $0x178] sm:$0xff]
    %v236 = vld [vmem:[#allocation10 + $0x180] sm:$0xff]
    %v237 = vld [vmem:[#allocation10 + $0x188] sm:$0xff]
    %v238 = vld [vmem:[#allocation10 + $0x190] sm:$0xff]
    %v239 = vld [vmem:[#allocation10 + $0x198] sm:$0xff]
    %v240 = vld [vmem:[#allocation10 + $0x1a0] sm:$0xff]
    %v241 = vld [vmem:[#allocation10 + $0x1a8] sm:$0xff]
    %v242 = vld [vmem:[#allocation10 + $0x1b0] sm:$0xff]
    %v243 = vld [vmem:[#allocation10 + $0x1b8] sm:$0xff]
    %v244 = vld [vmem:[#allocation10 + $0x1c0] sm:$0xff]
    %v245 = vld [vmem:[#allocation10 + $0x1c8] sm:$0xff]
    %v246 = vld [vmem:[#allocation10 + $0x1d0] sm:$0xff]
    %v247 = vld [vmem:[#allocation10 + $0x1d8] sm:$0xff]
    %v248 = vld [vmem:[#allocation10 + $0x1e0] sm:$0xff]
    %v249 = vld [vmem:[#allocation10 + $0x1e8] sm:$0xff]
    %v250 = vld [vmem:[#allocation10 + $0x1f0] sm:$0xff]
    %v251 = vld [vmem:[#allocation10 + $0x1f8] sm:$0xff]
    %v252 = vld [vmem:[%s6] sm:$0xf]
    %v253 = vld [vmem:[#allocation12] sm:$0xff]
    %v254 = vld [vmem:[#allocation12 + $0x8] sm:$0xff]
    %v255 = vld [vmem:[#allocation12 + $0x10] sm:$0xff]
    %v256 = vld [vmem:[#allocation12 + $0x18] sm:$0xff]
    %v257 = vld [vmem:[#allocation12 + $0x20] sm:$0xff]
    %v258 = vld [vmem:[#allocation12 + $0x28] sm:$0xff]
    %v259 = vld [vmem:[#allocation12 + $0x30] sm:$0xff]
    %v260 = vld [vmem:[#allocation12 + $0x38] sm:$0xff]
    %v261 = vld [vmem:[#allocation12 + $0x40] sm:$0xff]
    %v262 = vld [vmem:[#allocation12 + $0x48] sm:$0xff]
    %v263 = vld [vmem:[#allocation12 + $0x50] sm:$0xff]
    %v264 = vld [vmem:[#allocation12 + $0x58] sm:$0xff]
    %v265 = vld [vmem:[#allocation12 + $0x60] sm:$0xff]
    %v266 = vld [vmem:[#allocation12 + $0x68] sm:$0xff]
    %v267 = vld [vmem:[#allocation12 + $0x70] sm:$0xff]
    %v268 = vld [vmem:[#allocation12 + $0x78] sm:$0xff]
    %v269 = vld [vmem:[#allocation12 + $0x80] sm:$0xff]
    %v270 = vld [vmem:[#allocation12 + $0x88] sm:$0xff]
    %v271 = vld [vmem:[#allocation12 + $0x90] sm:$0xff]
    %v272 = vld [vmem:[#allocation12 + $0x98] sm:$0xff]
    %v273 = vld [vmem:[#allocation12 + $0xa0] sm:$0xff]
    %v274 = vld [vmem:[#allocation12 + $0xa8] sm:$0xff]
    %v275 = vld [vmem:[#allocation12 + $0xb0] sm:$0xff]
    %v276 = vld [vmem:[#allocation12 + $0xb8] sm:$0xff]
    %v277 = vld [vmem:[#allocation12 + $0xc0] sm:$0xff]
    %v278 = vld [vmem:[#allocation12 + $0xc8] sm:$0xff]
    %v279 = vld [vmem:[#allocation12 + $0xd0] sm:$0xff]
    %v280 = vld [vmem:[#allocation12 + $0xd8] sm:$0xff]
    %v281 = vld [vmem:[#allocation12 + $0xe0] sm:$0xff]
    %v282 = vld [vmem:[#allocation12 + $0xe8] sm:$0xff]
    %v283 = vld [vmem:[#allocation12 + $0xf0] sm:$0xff]
    %v284 = vld [vmem:[#allocation12 + $0xf8] sm:$0xff]
    %v285 = vld [vmem:[#allocation12 + $0x100] sm:$0xff]
    %v286 = vld [vmem:[#allocation12 + $0x108] sm:$0xff]
    %v287 = vld [vmem:[#allocation12 + $0x110] sm:$0xff]
    %v288 = vld [vmem:[#allocation12 + $0x118] sm:$0xff]
    %v289 = vld [vmem:[%s8] sm:$0x7]
    %v290 = vld [vmem:[#allocation6] sm:$0x3]
    %v292 = vperm.slane %v252, 0
    %v293 = vperm.slane %v252, 1
    %v294 = vperm.slane %v252, 2
    %v295 = vperm.slane %v252, 3
    %300 = vmatpush.msra.mxu0 %v248
    %301 = vmatpush.msra.mxu0 %v244
    %302 = vmatpush.msra.mxu0 %v240
    %303 = vmatpush.msra.mxu0 %v236
    %304 = vmatpush.msra.mxu0 %v232
    %305 = vmatpush.msra.mxu0 %v228
    %306 = vmatpush.msra.mxu0 %v224
    %307 = vmatpush.msra.mxu0 %v220
    %308 = vmatpush.msra.mxu0 %v216
    %309 = vmatpush.msra.mxu0 %v212
    %310 = vmatpush.msra.mxu0 %v208
    %311 = vmatpush.msra.mxu0 %v204
    %312 = vmatpush.msra.mxu0 %v200
    %313 = vmatpush.msra.mxu0 %v196
    %314 = vmatpush.msra.mxu0 %v192
    %315 = vmatpush.msra.mxu0 %v188
    %316 = vmatmul.f32.gmra.mxu0 %v290
    %v317 = vpop.f32.mrf.mxu0
    %v318 = vadd.f32 %v292, %v317
    %319 = vdwg.mxu0
    %320 = vmatpush.msra.mxu0 %v249
    %321 = vmatpush.msra.mxu0 %v245
    %322 = vmatpush.msra.mxu0 %v241
    %323 = vmatpush.msra.mxu0 %v237
    %324 = vmatpush.msra.mxu0 %v233
    %325 = vmatpush.msra.mxu0 %v229
    %326 = vmatpush.msra.mxu0 %v225
    %327 = vmatpush.msra.mxu0 %v221
    %328 = vmatpush.msra.mxu0 %v217
    %329 = vmatpush.msra.mxu0 %v213
    %330 = vmatpush.msra.mxu0 %v209
    %331 = vmatpush.msra.mxu0 %v205
    %332 = vmatpush.msra.mxu0 %v201
    %333 = vmatpush.msra.mxu0 %v197
    %334 = vmatpush.msra.mxu0 %v193
    %335 = vmatpush.msra.mxu0 %v189
    %336 = vmatmul.f32.gmra.mxu0 %v290
    %v337 = vpop.f32.mrf.mxu0
    %v338 = vadd.f32 %v293, %v337
    %339 = vdwg.mxu0
    %340 = vmatpush.msra.mxu0 %v250
    %341 = vmatpush.msra.mxu0 %v246
    %342 = vmatpush.msra.mxu0 %v242
    %343 = vmatpush.msra.mxu0 %v238
    %344 = vmatpush.msra.mxu0 %v234
    %345 = vmatpush.msra.mxu0 %v230
    %346 = vmatpush.msra.mxu0 %v226
    %347 = vmatpush.msra.mxu0 %v222
    %348 = vmatpush.msra.mxu0 %v218
    %349 = vmatpush.msra.mxu0 %v214
    %350 = vmatpush.msra.mxu0 %v210
    %351 = vmatpush.msra.mxu0 %v206
    %352 = vmatpush.msra.mxu0 %v202
    %353 = vmatpush.msra.mxu0 %v198
    %354 = vmatpush.msra.mxu0 %v194
    %355 = vmatpush.msra.mxu0 %v190
    %356 = vmatmul.f32.gmra.mxu0 %v290
    %v357 = vpop.f32.mrf.mxu0
    %v358 = vadd.f32 %v294, %v357
    %359 = vdwg.mxu0
    %360 = vmatpush.msra.mxu0 %v251
    %361 = vmatpush.msra.mxu0 %v247
    %362 = vmatpush.msra.mxu0 %v243
    %363 = vmatpush.msra.mxu0 %v239
    %364 = vmatpush.msra.mxu0 %v235
    %365 = vmatpush.msra.mxu0 %v231
    %366 = vmatpush.msra.mxu0 %v227
    %367 = vmatpush.msra.mxu0 %v223
    %368 = vmatpush.msra.mxu0 %v219
    %369 = vmatpush.msra.mxu0 %v215
    %370 = vmatpush.msra.mxu0 %v211
    %371 = vmatpush.msra.mxu0 %v207
    %372 = vmatpush.msra.mxu0 %v203
    %373 = vmatpush.msra.mxu0 %v199
    %374 = vmatpush.msra.mxu0 %v195
    %375 = vmatpush.msra.mxu0 %v191
    %376 = vmatmul.f32.gmra.mxu0 %v290
    %v377 = vpop.f32.mrf.mxu0
    %v378 = vadd.f32 %v295, %v377
    %379 = vdwg.mxu0
    %v381 = vrot.slane %v318, 1
    %v382 = vperm.slane %v318, 0
    %v383 = vperm.slane %v381, 0
    %v386 = vadd.f32 %v182, %v382
    %v387 = vadd.f32 %v185, %v383
    %v388 = vtanh.pop %v386
    %v389 = vtanh.pop %v387
    %v391 = vperm.slane %v187, 0
    %v393 = vmul.f32 %v388, %v391
    %v394 = vmul.f32 %v389, %v391
    %395 = vadd.xlane.f32.xlu0 %v393
    %v396 = vpop.xlane.xlu0 %395
    %397 = vadd.xlane.f32.xlu0 %v394
    %v398 = vpop.xlane.xlu0 %397
    %v399 = vrot.slane %v396, 4
    %v400 = vmax.f32 %v396, %v399
    %v401 = vrot.slane %v400, 2
    %v402 = vmax.f32 %v400, %v401
    %v403 = vrot.slane %v402, 1
    %v404 = vmax.f32 %v402, %v403
    %v405 = vrot.slane %v398, 4
    %v406 = vmax.f32 %v398, %v405
    %v407 = vrot.slane %v406, 2
    %v408 = vmax.f32 %v406, %v407
    %v409 = vrot.slane %v408, 1
    %v410 = vmax.f32 %v408, %v409
    %v411 = vsub.f32 %v396, %v404
    %v412 = vsub.f32 %v398, %v410
    %v413 = vmul.f32 %v411, 1.442695
    %v414 = vpow.pop %v413
    %v415 = vmul.f32 %v412, 1.442695
    %v416 = vpow.pop %v415
    %v417 = vrot.slane %v414, 4
    %v418 = vadd.f32 %v414, %v417
    %v419 = vrot.slane %v418, 2
    %v420 = vadd.f32 %v418, %v419
    %v421 = vrot.slane %v420, 1
    %v422 = vadd.f32 %v420, %v421
    %v423 = vrot.slane %v416, 4
    %v424 = vadd.f32 %v416, %v423
    %v425 = vrot.slane %v424, 2
    %v426 = vadd.f32 %v424, %v425
    %v427 = vrot.slane %v426, 1
    %v428 = vadd.f32 %v426, %v427
    %v429 = vrcp.pop %v422
    %v430 = vrcp.pop %v428
    %v431 = vmul.f32 %v414, %v429
    %v432 = vmul.f32 %v416, %v430
    %v433 = vmul.f32 %v431, %v143
    %v434 = vmul.f32 %v432, %v144
    %v435 = vsel %vm157, %v433, 0.0
    %v436 = vrot.slane %v435, 4
    %v437 = vadd.f32 %v435, %v436
    %v438 = vrot.slane %v437, 2
    %v439 = vadd.f32 %v437, %v438
    %v440 = vrot.slane %v439, 1
    %v441 = vadd.f32 %v439, %v440
    %v442 = vsel %vm157, %v434, 0.0
    %v443 = vrot.slane %v442, 4
    %v444 = vadd.f32 %v442, %v443
    %v445 = vrot.slane %v444, 2
    %v446 = vadd.f32 %v444, %v445
    %v447 = vrot.slane %v446, 1
    %v448 = vadd.f32 %v446, %v447
    %s449 = sld [smem:[#allocation2]]
    %s450 = smul.u32 %s449, 3
    %s451 = scalar_lea.vmem [#allocation13], %s450
    %v452 = vld [vmem:[%s451] sm:$0x7]
    %s453 = sld [smem:[#allocation2 + $0x1]]
    %s454 = smul.u32 %s453, 3
    %s455 = scalar_lea.vmem [#allocation13], %s454
    %v456 = vld [vmem:[%s455] sm:$0x7]
    %v458 = vperm.slane %v452, 0
    %v459 = vperm.slane %v452, 1
    %v460 = vperm.slane %v452, 2
    %v465 = vperm.slane %v456, 0
    %v466 = vperm.slane %v456, 1
    %v467 = vperm.slane %v456, 2
    %vm471 = vcmask 1040384
    %v472 = vsel %vm471, %v458, %v465
    %v473 = vsel %vm471, %v459, %v466
    %v474 = vsel %vm471, %v460, %v467
    %vm477 = vcmask 1041409
    %v478 = vsel %vm477, %v448, %v441
    %v479 = vsel %vm157, %v478, 0
    %481 = vmatpush.msra.mxu0 0.0
    %482 = vmatpush.msra.mxu0 0.0
    %483 = vmatpush.msra.mxu0 0.0
    %484 = vmatpush.msra.mxu0 0.0
    %485 = vmatpush.msra.mxu0 %v286
    %486 = vmatpush.msra.mxu0 %v283
    %487 = vmatpush.msra.mxu0 %v280
    %488 = vmatpush.msra.mxu0 %v277
    %489 = vmatpush.msra.mxu0 %v274
    %490 = vmatpush.msra.mxu0 %v271
    %491 = vmatpush.msra.mxu0 %v268
    %492 = vmatpush.msra.mxu0 %v265
    %493 = vmatpush.msra.mxu0 %v262
    %494 = vmatpush.msra.mxu0 %v259
    %495 = vmatpush.msra.mxu0 %v256
    %496 = vmatpush.msra.mxu0 %v253
    %497 = vmatmul.f32.gmra.mxu0 %v479
    %v498 = vpop.f32.mrf.mxu0
    %v499 = vadd.f32 %v472, %v498
    %500 = vdwg.mxu0
    %501 = vmatpush.msra.mxu0 0.0
    %502 = vmatpush.msra.mxu0 0.0
    %503 = vmatpush.msra.mxu0 0.0
    %504 = vmatpush.msra.mxu0 0.0
    %505 = vmatpush.msra.mxu0 %v287
    %506 = vmatpush.msra.mxu0 %v284
    %507 = vmatpush.msra.mxu0 %v281
    %508 = vmatpush.msra.mxu0 %v278
    %509 = vmatpush.msra.mxu0 %v275
    %510 = vmatpush.msra.mxu0 %v272
    %511 = vmatpush.msra.mxu0 %v269
    %512 = vmatpush.msra.mxu0 %v266
    %513 = vmatpush.msra.mxu0 %v263
    %514 = vmatpush.msra.mxu0 %v260
    %515 = vmatpush.msra.mxu0 %v257
    %516 = vmatpush.msra.mxu0 %v254
    %517 = vmatmul.f32.gmra.mxu0 %v479
    %v518 = vpop.f32.mrf.mxu0
    %v519 = vadd.f32 %v473, %v518
    %520 = vdwg.mxu0
    %521 = vmatpush.msra.mxu0 0.0
    %522 = vmatpush.msra.mxu0 0.0
    %523 = vmatpush.msra.mxu0 0.0
    %524 = vmatpush.msra.mxu0 0.0
    %525 = vmatpush.msra.mxu0 %v288
    %526 = vmatpush.msra.mxu0 %v285
    %527 = vmatpush.msra.mxu0 %v282
    %528 = vmatpush.msra.mxu0 %v279
    %529 = vmatpush.msra.mxu0 %v276
    %530 = vmatpush.msra.mxu0 %v273
    %531 = vmatpush.msra.mxu0 %v270
    %532 = vmatpush.msra.mxu0 %v267
    %533 = vmatpush.msra.mxu0 %v264
    %534 = vmatpush.msra.mxu0 %v261
    %535 = vmatpush.msra.mxu0 %v258
    %536 = vmatpush.msra.mxu0 %v255
    %537 = vmatmul.f32.gmra.mxu0 %v479
    %v538 = vpop.f32.mrf.mxu0
    %v539 = vadd.f32 %v474, %v538
    %540 = vdwg.mxu0
    %v542 = vperm.slane %v289, 0
    %v543 = vperm.slane %v289, 1
    %v544 = vperm.slane %v289, 2
    %v548 = vadd.f32 %v499, %v542
    %v549 = vadd.f32 %v519, %v543
    %v550 = vadd.f32 %v539, %v544
    %v551 = vadd.f32 %v548, %v338
    %v552 = vxor.u32 %v551, 2147483648
    %v553 = vmul.f32 %v552, 1.442695
    %v554 = vpow.pop %v553
    %v555 = vadd.f32 %v554, 1.0
    %v556 = vrcp.pop %v555
    %v557 = vmul.f32 %v555, %v556
    %v558 = vsub.f32 1.0, %v557
    %v559 = vmul.f32 %v556, %v558
    %v560 = vadd.f32 %v556, %v559
    %vm561 = vweird.f32 %v555
    %vm562 = vweird.f32 %v556
    %vm563 = vmor %vm561, %vm562
    %v564 = vsel %vm563, %v556, %v560
    %v565 = vand.u32 2147483647, %v555
    %vm566 = vcmp.eq.f32.partialorder %v565, 8.507059e+37
    %v567 = vand.u32 %v555, 2147483648
    %v568 = vor.u32 1.1754944e-38, %v567
    %v569 = vsel %vm566, %v568, %v564
    %v570 = vmul.f32 1.0, %v569
    %v571 = vadd.f32 %v549, %v358
    %v572 = vxor.u32 %v571, 2147483648
    %v573 = vmul.f32 %v572, 1.442695
    %v574 = vpow.pop %v573
    %v575 = vadd.f32 %v574, 1.0
    %v576 = vrcp.pop %v575
    %v577 = vmul.f32 %v575, %v576
    %v578 = vsub.f32 1.0, %v577
    %v579 = vmul.f32 %v576, %v578
    %v580 = vadd.f32 %v576, %v579
    %vm581 = vweird.f32 %v575
    %vm582 = vweird.f32 %v576
    %vm583 = vmor %vm581, %vm582
    %v584 = vsel %vm583, %v576, %v580
    %v585 = vand.u32 2147483647, %v575
    %vm586 = vcmp.eq.f32.partialorder %v585, 8.507059e+37
    %v587 = vand.u32 %v575, 2147483648
    %v588 = vor.u32 1.1754944e-38, %v587
    %v589 = vsel %vm586, %v588, %v584
    %v590 = vmul.f32 1.0, %v589
    %v591 = vmul.f32 %v570, %v378
    %v592 = vadd.f32 %v550, %v591
    %v593 = vtanh.pop %v592
    %v594 = vsub.f32 1.0, %v590
    %v595 = vmul.f32 %v594, %v593
    %v596 = vmul.f32 %v590, %v290
    %v597 = vadd.f32 %v595, %v596
    %598 = vst [vmem:[#allocation15] sm:$0x3] %v597
    %vm599 = vcmask 7168
    %600 = vst.msk [vmem:[%s11] sm:$0xff] %vm599, %v431
    %601 = vst.msk [vmem:[%s11 + $0x8] sm:$0xff] %vm599, %v432
    %602 = vmatpush.msra.mxu0 %v248
    %603 = vmatpush.msra.mxu0 %v244
    %604 = vmatpush.msra.mxu0 %v240
    %605 = vmatpush.msra.mxu0 %v236
    %606 = vmatpush.msra.mxu0 %v232
    %607 = vmatpush.msra.mxu0 %v228
    %608 = vmatpush.msra.mxu0 %v224
    %609 = vmatpush.msra.mxu0 %v220
    %610 = vmatpush.msra.mxu0 %v216
    %611 = vmatpush.msra.mxu0 %v212
    %612 = vmatpush.msra.mxu0 %v208
    %613 = vmatpush.msra.mxu0 %v204
    %614 = vmatpush.msra.mxu0 %v200
    %615 = vmatpush.msra.mxu0 %v196
    %616 = vmatpush.msra.mxu0 %v192
    %617 = vmatpush.msra.mxu0 %v188
    %618 = vmatmul.f32.gmra.mxu0 %v597
    %v619 = vpop.f32.mrf.mxu0
    %v620 = vadd.f32 %v292, %v619
    %621 = vdwg.mxu0
    %622 = vmatpush.msra.mxu0 %v249
    %623 = vmatpush.msra.mxu0 %v245
    %624 = vmatpush.msra.mxu0 %v241
    %625 = vmatpush.msra.mxu0 %v237
    %626 = vmatpush.msra.mxu0 %v233
    %627 = vmatpush.msra.mxu0 %v229
    %628 = vmatpush.msra.mxu0 %v225
    %629 = vmatpush.msra.mxu0 %v221
    %630 = vmatpush.msra.mxu0 %v217
    %631 = vmatpush.msra.mxu0 %v213
    %632 = vmatpush.msra.mxu0 %v209
    %633 = vmatpush.msra.mxu0 %v205
    %634 = vmatpush.msra.mxu0 %v201
    %635 = vmatpush.msra.mxu0 %v197
    %636 = vmatpush.msra.mxu0 %v193
    %637 = vmatpush.msra.mxu0 %v189
    %638 = vmatmul.f32.gmra.mxu0 %v597
    %v639 = vpop.f32.mrf.mxu0
    %v640 = vadd.f32 %v293, %v639
    %641 = vdwg.mxu0
    %642 = vmatpush.msra.mxu0 %v250
    %643 = vmatpush.msra.mxu0 %v246
    %644 = vmatpush.msra.mxu0 %v242
    %645 = vmatpush.msra.mxu0 %v238
    %646 = vmatpush.msra.mxu0 %v234
    %647 = vmatpush.msra.mxu0 %v230
    %648 = vmatpush.msra.mxu0 %v226
    %649 = vmatpush.msra.mxu0 %v222
    %650 = vmatpush.msra.mxu0 %v218
    %651 = vmatpush.msra.mxu0 %v214
    %652 = vmatpush.msra.mxu0 %v210
    %653 = vmatpush.msra.mxu0 %v206
    %654 = vmatpush.msra.mxu0 %v202
    %655 = vmatpush.msra.mxu0 %v198
    %656 = vmatpush.msra.mxu0 %v194
    %657 = vmatpush.msra.mxu0 %v190
    %658 = vmatmul.f32.gmra.mxu0 %v597
    %v659 = vpop.f32.mrf.mxu0
    %v660 = vadd.f32 %v294, %v659
    %661 = vdwg.mxu0
    %662 = vmatpush.msra.mxu0 %v251
    %663 = vmatpush.msra.mxu0 %v247
    %664 = vmatpush.msra.mxu0 %v243
    %665 = vmatpush.msra.mxu0 %v239
    %666 = vmatpush.msra.mxu0 %v235
    %667 = vmatpush.msra.mxu0 %v231
    %668 = vmatpush.msra.mxu0 %v227
    %669 = vmatpush.msra.mxu0 %v223
    %670 = vmatpush.msra.mxu0 %v219
    %671 = vmatpush.msra.mxu0 %v215
    %672 = vmatpush.msra.mxu0 %v211
    %673 = vmatpush.msra.mxu0 %v207
    %674 = vmatpush.msra.mxu0 %v203
    %675 = vmatpush.msra.mxu0 %v199
    %676 = vmatpush.msra.mxu0 %v195
    %677 = vmatpush.msra.mxu0 %v191
    %678 = vmatmul.f32.gmra.mxu0 %v597
    %v679 = vpop.f32.mrf.mxu0
    %v680 = vadd.f32 %v295, %v679
    %681 = vdwg.mxu0
    %v683 = vrot.slane %v620, 1
    %v684 = vperm.slane %v620, 0
    %v685 = vperm.slane %v683, 0
    %v688 = vadd.f32 %v182, %v684
    %v689 = vadd.f32 %v185, %v685
    %v690 = vtanh.pop %v688
    %v691 = vtanh.pop %v689
    %v692 = vmul.f32 %v690, %v391
    %v693 = vmul.f32 %v691, %v391
    %694 = vadd.xlane.f32.xlu0 %v692
    %v695 = vpop.xlane.xlu0 %694
    %696 = vadd.xlane.f32.xlu0 %v693
    %v697 = vpop.xlane.xlu0 %696
    %v698 = vrot.slane %v695, 4
    %v699 = vmax.f32 %v695, %v698
    %v700 = vrot.slane %v699, 2
    %v701 = vmax.f32 %v699, %v700
    %v702 = vrot.slane %v701, 1
    %v703 = vmax.f32 %v701, %v702
    %v704 = vrot.slane %v697, 4
    %v705 = vmax.f32 %v697, %v704
    %v706 = vrot.slane %v705, 2
    %v707 = vmax.f32 %v705, %v706
    %v708 = vrot.slane %v707, 1
    %v709 = vmax.f32 %v707, %v708
    %v710 = vsub.f32 %v695, %v703
    %v711 = vsub.f32 %v697, %v709
    %v712 = vmul.f32 %v710, 1.442695
    %v713 = vpow.pop %v712
    %v714 = vmul.f32 %v711, 1.442695
    %v715 = vpow.pop %v714
    %v716 = vrot.slane %v713, 4
    %v717 = vadd.f32 %v713, %v716
    %v718 = vrot.slane %v717, 2
    %v719 = vadd.f32 %v717, %v718
    %v720 = vrot.slane %v719, 1
    %v721 = vadd.f32 %v719, %v720
    %v722 = vrot.slane %v715, 4
    %v723 = vadd.f32 %v715, %v722
    %v724 = vrot.slane %v723, 2
    %v725 = vadd.f32 %v723, %v724
    %v726 = vrot.slane %v725, 1
    %v727 = vadd.f32 %v725, %v726
    %v728 = vrcp.pop %v721
    %v729 = vrcp.pop %v727
    %v730 = vmul.f32 %v713, %v728
    %v731 = vmul.f32 %v715, %v729
    %v732 = vmul.f32 %v730, %v143
    %v733 = vmul.f32 %v731, %v144
    %v734 = vsel %vm157, %v732, 0.0
    %v735 = vrot.slane %v734, 4
    %v736 = vadd.f32 %v734, %v735
    %v737 = vrot.slane %v736, 2
    %v738 = vadd.f32 %v736, %v737
    %v739 = vrot.slane %v738, 1
    %v740 = vadd.f32 %v738, %v739
    %v741 = vsel %vm157, %v733, 0.0
    %v742 = vrot.slane %v741, 4
    %v743 = vadd.f32 %v741, %v742
    %v744 = vrot.slane %v743, 2
    %v745 = vadd.f32 %v743, %v744
    %v746 = vrot.slane %v745, 1
    %v747 = vadd.f32 %v745, %v746
    %s748 = sld [smem:[#allocation2 + $0x80]]
    %s749 = smul.u32 %s748, 3
    %s750 = scalar_lea.vmem [#allocation13], %s749
    %v751 = vld [vmem:[%s750] sm:$0x7]
    %s752 = sld [smem:[#allocation2 + $0x81]]
    %s753 = smul.u32 %s752, 3
    %s754 = scalar_lea.vmem [#allocation13], %s753
    %v755 = vld [vmem:[%s754] sm:$0x7]
    %v757 = vperm.slane %v751, 0
    %v758 = vperm.slane %v751, 1
    %v759 = vperm.slane %v751, 2
    %v764 = vperm.slane %v755, 0
    %v765 = vperm.slane %v755, 1
    %v766 = vperm.slane %v755, 2
    %v770 = vsel %vm471, %v757, %v764
    %v771 = vsel %vm471, %v758, %v765
    %v772 = vsel %vm471, %v759, %v766
    %v775 = vsel %vm477, %v747, %v740
    %v776 = vsel %vm157, %v775, 0
    %778 = vmatpush.msra.mxu0 0.0
    %779 = vmatpush.msra.mxu0 0.0
    %780 = vmatpush.msra.mxu0 0.0
    %781 = vmatpush.msra.mxu0 0.0
    %782 = vmatpush.msra.mxu0 %v286
    %783 = vmatpush.msra.mxu0 %v283
    %784 = vmatpush.msra.mxu0 %v280
    %785 = vmatpush.msra.mxu0 %v277
    %786 = vmatpush.msra.mxu0 %v274
    %787 = vmatpush.msra.mxu0 %v271
    %788 = vmatpush.msra.mxu0 %v268
    %789 = vmatpush.msra.mxu0 %v265
    %790 = vmatpush.msra.mxu0 %v262
    %791 = vmatpush.msra.mxu0 %v259
    %792 = vmatpush.msra.mxu0 %v256
    %793 = vmatpush.msra.mxu0 %v253
    %794 = vmatmul.f32.gmra.mxu0 %v776
    %v795 = vpop.f32.mrf.mxu0
    %v796 = vadd.f32 %v770, %v795
    %797 = vdwg.mxu0
    %798 = vmatpush.msra.mxu0 0.0
    %799 = vmatpush.msra.mxu0 0.0
    %800 = vmatpush.msra.mxu0 0.0
    %801 = vmatpush.msra.mxu0 0.0
    %802 = vmatpush.msra.mxu0 %v287
    %803 = vmatpush.msra.mxu0 %v284
    %804 = vmatpush.msra.mxu0 %v281
    %805 = vmatpush.msra.mxu0 %v278
    %806 = vmatpush.msra.mxu0 %v275
    %807 = vmatpush.msra.mxu0 %v272
    %808 = vmatpush.msra.mxu0 %v269
    %809 = vmatpush.msra.mxu0 %v266
    %810 = vmatpush.msra.mxu0 %v263
    %811 = vmatpush.msra.mxu0 %v260
    %812 = vmatpush.msra.mxu0 %v257
    %813 = vmatpush.msra.mxu0 %v254
    %814 = vmatmul.f32.gmra.mxu0 %v776
    %v815 = vpop.f32.mrf.mxu0
    %v816 = vadd.f32 %v771, %v815
    %817 = vdwg.mxu0
    %818 = vmatpush.msra.mxu0 0.0
    %819 = vmatpush.msra.mxu0 0.0
    %820 = vmatpush.msra.mxu0 0.0
    %821 = vmatpush.msra.mxu0 0.0
    %822 = vmatpush.msra.mxu0 %v288
    %823 = vmatpush.msra.mxu0 %v285
    %824 = vmatpush.msra.mxu0 %v282
    %825 = vmatpush.msra.mxu0 %v279
    %826 = vmatpush.msra.mxu0 %v276
    %827 = vmatpush.msra.mxu0 %v273
    %828 = vmatpush.msra.mxu0 %v270
    %829 = vmatpush.msra.mxu0 %v267
    %830 = vmatpush.msra.mxu0 %v264
    %831 = vmatpush.msra.mxu0 %v261
    %832 = vmatpush.msra.mxu0 %v258
    %833 = vmatpush.msra.mxu0 %v255
    %834 = vmatmul.f32.gmra.mxu0 %v776
    %v835 = vpop.f32.mrf.mxu0
    %v836 = vadd.f32 %v772, %v835
    %837 = vdwg.mxu0
    %v838 = vadd.f32 %v796, %v542
    %v839 = vadd.f32 %v816, %v543
    %v840 = vadd.f32 %v836, %v544
    %v841 = vadd.f32 %v838, %v640
    %v842 = vxor.u32 %v841, 2147483648
    %v843 = vmul.f32 %v842, 1.442695
    %v844 = vpow.pop %v843
    %v845 = vadd.f32 %v844, 1.0
    %v846 = vrcp.pop %v845
    %v847 = vmul.f32 %v845, %v846
    %v848 = vsub.f32 1.0, %v847
    %v849 = vmul.f32 %v846, %v848
    %v850 = vadd.f32 %v846, %v849
    %vm851 = vweird.f32 %v845
    %vm852 = vweird.f32 %v846
    %vm853 = vmor %vm851, %vm852
    %v854 = vsel %vm853, %v846, %v850
    %v855 = vand.u32 2147483647, %v845
    %vm856 = vcmp.eq.f32.partialorder %v855, 8.507059e+37
    %v857 = vand.u32 %v845, 2147483648
    %v858 = vor.u32 1.1754944e-38, %v857
    %v859 = vsel %vm856, %v858, %v854
    %v860 = vmul.f32 1.0, %v859
    %v861 = vadd.f32 %v839, %v660
    %v862 = vxor.u32 %v861, 2147483648
    %v863 = vmul.f32 %v862, 1.442695
    %v864 = vpow.pop %v863
    %v865 = vadd.f32 %v864, 1.0
    %v866 = vrcp.pop %v865
    %v867 = vmul.f32 %v865, %v866
    %v868 = vsub.f32 1.0, %v867
    %v869 = vmul.f32 %v866, %v868
    %v870 = vadd.f32 %v866, %v869
    %vm871 = vweird.f32 %v865
    %vm872 = vweird.f32 %v866
    %vm873 = vmor %vm871, %vm872
    %v874 = vsel %vm873, %v866, %v870
    %v875 = vand.u32 2147483647, %v865
    %vm876 = vcmp.eq.f32.partialorder %v875, 8.507059e+37
    %v877 = vand.u32 %v865, 2147483648
    %v878 = vor.u32 1.1754944e-38, %v877
    %v879 = vsel %vm876, %v878, %v874
    %v880 = vmul.f32 1.0, %v879
    %v881 = vmul.f32 %v860, %v680
    %v882 = vadd.f32 %v840, %v881
    %v883 = vtanh.pop %v882
    %v884 = vsub.f32 1.0, %v880
    %v885 = vmul.f32 %v884, %v883
    %v886 = vmul.f32 %v880, %v597
    %v887 = vadd.f32 %v885, %v886
    %s888 = scalar_lea.vmem [#allocation15], 2
    %889 = vst [vmem:[%s888] sm:$0x3] %v887
    %s890 = scalar_lea.vmem %s11, 16
    %891 = vst.msk [vmem:[%s890] sm:$0xff] %vm599, %v730
    %892 = vst.msk [vmem:[%s890 + $0x8] sm:$0xff] %vm599, %v731
    %893 = vmatpush.msra.mxu0 %v248
    %894 = vmatpush.msra.mxu0 %v244
    %895 = vmatpush.msra.mxu0 %v240
    %896 = vmatpush.msra.mxu0 %v236
    %897 = vmatpush.msra.mxu0 %v232
    %898 = vmatpush.msra.mxu0 %v228
    %899 = vmatpush.msra.mxu0 %v224
    %900 = vmatpush.msra.mxu0 %v220
    %901 = vmatpush.msra.mxu0 %v216
    %902 = vmatpush.msra.mxu0 %v212
    %903 = vmatpush.msra.mxu0 %v208
    %904 = vmatpush.msra.mxu0 %v204
    %905 = vmatpush.msra.mxu0 %v200
    %906 = vmatpush.msra.mxu0 %v196
    %907 = vmatpush.msra.mxu0 %v192
    %908 = vmatpush.msra.mxu0 %v188
    %909 = vmatmul.f32.gmra.mxu0 %v887
    %v910 = vpop.f32.mrf.mxu0
    %v911 = vadd.f32 %v292, %v910
    %912 = vdwg.mxu0
    %913 = vmatpush.msra.mxu0 %v249
    %914 = vmatpush.msra.mxu0 %v245
    %915 = vmatpush.msra.mxu0 %v241
    %916 = vmatpush.msra.mxu0 %v237
    %917 = vmatpush.msra.mxu0 %v233
    %918 = vmatpush.msra.mxu0 %v229
    %919 = vmatpush.msra.mxu0 %v225
    %920 = vmatpush.msra.mxu0 %v221
    %921 = vmatpush.msra.mxu0 %v217
    %922 = vmatpush.msra.mxu0 %v213
    %923 = vmatpush.msra.mxu0 %v209
    %924 = vmatpush.msra.mxu0 %v205
    %925 = vmatpush.msra.mxu0 %v201
    %926 = vmatpush.msra.mxu0 %v197
    %927 = vmatpush.msra.mxu0 %v193
    %928 = vmatpush.msra.mxu0 %v189
    %929 = vmatmul.f32.gmra.mxu0 %v887
    %v930 = vpop.f32.mrf.mxu0
    %v931 = vadd.f32 %v293, %v930
    %932 = vdwg.mxu0
    %933 = vmatpush.msra.mxu0 %v250
    %934 = vmatpush.msra.mxu0 %v246
    %935 = vmatpush.msra.mxu0 %v242
    %936 = vmatpush.msra.mxu0 %v238
    %937 = vmatpush.msra.mxu0 %v234
    %938 = vmatpush.msra.mxu0 %v230
    %939 = vmatpush.msra.mxu0 %v226
    %940 = vmatpush.msra.mxu0 %v222
    %941 = vmatpush.msra.mxu0 %v218
    %942 = vmatpush.msra.mxu0 %v214
    %943 = vmatpush.msra.mxu0 %v210
    %944 = vmatpush.msra.mxu0 %v206
    %945 = vmatpush.msra.mxu0 %v202
    %946 = vmatpush.msra.mxu0 %v198
    %947 = vmatpush.msra.mxu0 %v194
    %948 = vmatpush.msra.mxu0 %v190
    %949 = vmatmul.f32.gmra.mxu0 %v887
    %v950 = vpop.f32.mrf.mxu0
    %v951 = vadd.f32 %v294, %v950
    %952 = vdwg.mxu0
    %953 = vmatpush.msra.mxu0 %v251
    %954 = vmatpush.msra.mxu0 %v247
    %955 = vmatpush.msra.mxu0 %v243
    %956 = vmatpush.msra.mxu0 %v239
    %957 = vmatpush.msra.mxu0 %v235
    %958 = vmatpush.msra.mxu0 %v231
    %959 = vmatpush.msra.mxu0 %v227
    %960 = vmatpush.msra.mxu0 %v223
    %961 = vmatpush.msra.mxu0 %v219
    %962 = vmatpush.msra.mxu0 %v215
    %963 = vmatpush.msra.mxu0 %v211
    %964 = vmatpush.msra.mxu0 %v207
    %965 = vmatpush.msra.mxu0 %v203
    %966 = vmatpush.msra.mxu0 %v199
    %967 = vmatpush.msra.mxu0 %v195
    %968 = vmatpush.msra.mxu0 %v191
    %969 = vmatmul.f32.gmra.mxu0 %v887
    %v970 = vpop.f32.mrf.mxu0
    %v971 = vadd.f32 %v295, %v970
    %972 = vdwg.mxu0
    %v974 = vrot.slane %v911, 1
    %v975 = vperm.slane %v911, 0
    %v976 = vperm.slane %v974, 0
    %v979 = vadd.f32 %v182, %v975
    %v980 = vadd.f32 %v185, %v976
    %v981 = vtanh.pop %v979
    %v982 = vtanh.pop %v980
    %v983 = vmul.f32 %v981, %v391
    %v984 = vmul.f32 %v982, %v391
    %985 = vadd.xlane.f32.xlu0 %v983
    %v986 = vpop.xlane.xlu0 %985
    %987 = vadd.xlane.f32.xlu0 %v984
    %v988 = vpop.xlane.xlu0 %987
    %v989 = vrot.slane %v986, 4
    %v990 = vmax.f32 %v986, %v989
    %v991 = vrot.slane %v990, 2
    %v992 = vmax.f32 %v990, %v991
    %v993 = vrot.slane %v992, 1
    %v994 = vmax.f32 %v992, %v993
    %v995 = vrot.slane %v988, 4
    %v996 = vmax.f32 %v988, %v995
    %v997 = vrot.slane %v996, 2
    %v998 = vmax.f32 %v996, %v997
    %v999 = vrot.slane %v998, 1
    %v1000 = vmax.f32 %v998, %v999
    %v1001 = vsub.f32 %v986, %v994
    %v1002 = vsub.f32 %v988, %v1000
    %v1003 = vmul.f32 %v1001, 1.442695
    %v1004 = vpow.pop %v1003
    %v1005 = vmul.f32 %v1002, 1.442695
    %v1006 = vpow.pop %v1005
    %v1007 = vrot.slane %v1004, 4
    %v1008 = vadd.f32 %v1004, %v1007
    %v1009 = vrot.slane %v1008, 2
    %v1010 = vadd.f32 %v1008, %v1009
    %v1011 = vrot.slane %v1010, 1
    %v1012 = vadd.f32 %v1010, %v1011
    %v1013 = vrot.slane %v1006, 4
    %v1014 = vadd.f32 %v1006, %v1013
    %v1015 = vrot.slane %v1014, 2
    %v1016 = vadd.f32 %v1014, %v1015
    %v1017 = vrot.slane %v1016, 1
    %v1018 = vadd.f32 %v1016, %v1017
    %v1019 = vrcp.pop %v1012
    %v1020 = vrcp.pop %v1018
    %v1021 = vmul.f32 %v1004, %v1019
    %v1022 = vmul.f32 %v1006, %v1020
    %v1023 = vmul.f32 %v1021, %v143
    %v1024 = vmul.f32 %v1022, %v144
    %v1025 = vsel %vm157, %v1023, 0.0
    %v1026 = vrot.slane %v1025, 4
    %v1027 = vadd.f32 %v1025, %v1026
    %v1028 = vrot.slane %v1027, 2
    %v1029 = vadd.f32 %v1027, %v1028
    %v1030 = vrot.slane %v1029, 1
    %v1031 = vadd.f32 %v1029, %v1030
    %v1032 = vsel %vm157, %v1024, 0.0
    %v1033 = vrot.slane %v1032, 4
    %v1034 = vadd.f32 %v1032, %v1033
    %v1035 = vrot.slane %v1034, 2
    %v1036 = vadd.f32 %v1034, %v1035
    %v1037 = vrot.slane %v1036, 1
    %v1038 = vadd.f32 %v1036, %v1037
    %s1039 = sld [smem:[#allocation2 + $0x100]]
    %s1040 = smul.u32 %s1039, 3
    %s1041 = scalar_lea.vmem [#allocation13], %s1040
    %v1042 = vld [vmem:[%s1041] sm:$0x7]
    %s1043 = sld [smem:[#allocation2 + $0x101]]
    %s1044 = smul.u32 %s1043, 3
    %s1045 = scalar_lea.vmem [#allocation13], %s1044
    %v1046 = vld [vmem:[%s1045] sm:$0x7]
    %v1048 = vperm.slane %v1042, 0
    %v1049 = vperm.slane %v1042, 1
    %v1050 = vperm.slane %v1042, 2
    %v1055 = vperm.slane %v1046, 0
    %v1056 = vperm.slane %v1046, 1
    %v1057 = vperm.slane %v1046, 2
    %v1061 = vsel %vm471, %v1048, %v1055
    %v1062 = vsel %vm471, %v1049, %v1056
    %v1063 = vsel %vm471, %v1050, %v1057
    %v1066 = vsel %vm477, %v1038, %v1031
    %v1067 = vsel %vm157, %v1066, 0
    %1069 = vmatpush.msra.mxu0 0.0
    %1070 = vmatpush.msra.mxu0 0.0
    %1071 = vmatpush.msra.mxu0 0.0
    %1072 = vmatpush.msra.mxu0 0.0
    %1073 = vmatpush.msra.mxu0 %v286
    %1074 = vmatpush.msra.mxu0 %v283
    %1075 = vmatpush.msra.mxu0 %v280
    %1076 = vmatpush.msra.mxu0 %v277
    %1077 = vmatpush.msra.mxu0 %v274
    %1078 = vmatpush.msra.mxu0 %v271
    %1079 = vmatpush.msra.mxu0 %v268
    %1080 = vmatpush.msra.mxu0 %v265
    %1081 = vmatpush.msra.mxu0 %v262
    %1082 = vmatpush.msra.mxu0 %v259
    %1083 = vmatpush.msra.mxu0 %v256
    %1084 = vmatpush.msra.mxu0 %v253
    %1085 = vmatmul.f32.gmra.mxu0 %v1067
    %v1086 = vpop.f32.mrf.mxu0
    %v1087 = vadd.f32 %v1061, %v1086
    %1088 = vdwg.mxu0
    %1089 = vmatpush.msra.mxu0 0.0
    %1090 = vmatpush.msra.mxu0 0.0
    %1091 = vmatpush.msra.mxu0 0.0
    %1092 = vmatpush.msra.mxu0 0.0
    %1093 = vmatpush.msra.mxu0 %v287
    %1094 = vmatpush.msra.mxu0 %v284
    %1095 = vmatpush.msra.mxu0 %v281
    %1096 = vmatpush.msra.mxu0 %v278
    %1097 = vmatpush.msra.mxu0 %v275
    %1098 = vmatpush.msra.mxu0 %v272
    %1099 = vmatpush.msra.mxu0 %v269
    %1100 = vmatpush.msra.mxu0 %v266
    %1101 = vmatpush.msra.mxu0 %v263
    %1102 = vmatpush.msra.mxu0 %v260
    %1103 = vmatpush.msra.mxu0 %v257
    %1104 = vmatpush.msra.mxu0 %v254
    %1105 = vmatmul.f32.gmra.mxu0 %v1067
    %v1106 = vpop.f32.mrf.mxu0
    %v1107 = vadd.f32 %v1062, %v1106
    %1108 = vdwg.mxu0
    %1109 = vmatpush.msra.mxu0 0.0
    %1110 = vmatpush.msra.mxu0 0.0
    %1111 = vmatpush.msra.mxu0 0.0
    %1112 = vmatpush.msra.mxu0 0.0
    %1113 = vmatpush.msra.mxu0 %v288
    %1114 = vmatpush.msra.mxu0 %v285
    %1115 = vmatpush.msra.mxu0 %v282
    %1116 = vmatpush.msra.mxu0 %v279
    %1117 = vmatpush.msra.mxu0 %v276
    %1118 = vmatpush.msra.mxu0 %v273
    %1119 = vmatpush.msra.mxu0 %v270
    %1120 = vmatpush.msra.mxu0 %v267
    %1121 = vmatpush.msra.mxu0 %v264
    %1122 = vmatpush.msra.mxu0 %v261
    %1123 = vmatpush.msra.mxu0 %v258
    %1124 = vmatpush.msra.mxu0 %v255
    %1125 = vmatmul.f32.gmra.mxu0 %v1067
    %v1126 = vpop.f32.mrf.mxu0
    %v1127 = vadd.f32 %v1063, %v1126
    %1128 = vdwg.mxu0
    %v1129 = vadd.f32 %v1087, %v542
    %v1130 = vadd.f32 %v1107, %v543
    %v1131 = vadd.f32 %v1127, %v544
    %v1132 = vadd.f32 %v1129, %v931
    %v1133 = vxor.u32 %v1132, 2147483648
    %v1134 = vmul.f32 %v1133, 1.442695
    %v1135 = vpow.pop %v1134
    %v1136 = vadd.f32 %v1135, 1.0
    %v1137 = vrcp.pop %v1136
    %v1138 = vmul.f32 %v1136, %v1137
    %v1139 = vsub.f32 1.0, %v1138
    %v1140 = vmul.f32 %v1137, %v1139
    %v1141 = vadd.f32 %v1137, %v1140
    %vm1142 = vweird.f32 %v1136
    %vm1143 = vweird.f32 %v1137
    %vm1144 = vmor %vm1142, %vm1143
    %v1145 = vsel %vm1144, %v1137, %v1141
    %v1146 = vand.u32 2147483647, %v1136
    %vm1147 = vcmp.eq.f32.partialorder %v1146, 8.507059e+37
    %v1148 = vand.u32 %v1136, 2147483648
    %v1149 = vor.u32 1.1754944e-38, %v1148
    %v1150 = vsel %vm1147, %v1149, %v1145
    %v1151 = vmul.f32 1.0, %v1150
    %v1152 = vadd.f32 %v1130, %v951
    %v1153 = vxor.u32 %v1152, 2147483648
    %v1154 = vmul.f32 %v1153, 1.442695
    %v1155 = vpow.pop %v1154
    %v1156 = vadd.f32 %v1155, 1.0
    %v1157 = vrcp.pop %v1156
    %v1158 = vmul.f32 %v1156, %v1157
    %v1159 = vsub.f32 1.0, %v1158
    %v1160 = vmul.f32 %v1157, %v1159
    %v1161 = vadd.f32 %v1157, %v1160
    %vm1162 = vweird.f32 %v1156
    %vm1163 = vweird.f32 %v1157
    %vm1164 = vmor %vm1162, %vm1163
    %v1165 = vsel %vm1164, %v1157, %v1161
    %v1166 = vand.u32 2147483647, %v1156
    %vm1167 = vcmp.eq.f32.partialorder %v1166, 8.507059e+37
    %v1168 = vand.u32 %v1156, 2147483648
    %v1169 = vor.u32 1.1754944e-38, %v1168
    %v1170 = vsel %vm1167, %v1169, %v1165
    %v1171 = vmul.f32 1.0, %v1170
    %v1172 = vmul.f32 %v1151, %v971
    %v1173 = vadd.f32 %v1131, %v1172
    %v1174 = vtanh.pop %v1173
    %v1175 = vsub.f32 1.0, %v1171
    %v1176 = vmul.f32 %v1175, %v1174
    %v1177 = vmul.f32 %v1171, %v887
    %v1178 = vadd.f32 %v1176, %v1177
    %s1179 = scalar_lea.vmem [#allocation15], 4
    %1180 = vst [vmem:[%s1179] sm:$0x3] %v1178
    %s1181 = scalar_lea.vmem %s11, 32
    %1182 = vst.msk [vmem:[%s1181] sm:$0xff] %vm599, %v1021
    %1183 = vst.msk [vmem:[%s1181 + $0x8] sm:$0xff] %vm599, %v1022
    %1184 = vmatpush.msra.mxu0 %v248
    %1185 = vmatpush.msra.mxu0 %v244
    %1186 = vmatpush.msra.mxu0 %v240
    %1187 = vmatpush.msra.mxu0 %v236
    %1188 = vmatpush.msra.mxu0 %v232
    %1189 = vmatpush.msra.mxu0 %v228
    %1190 = vmatpush.msra.mxu0 %v224
    %1191 = vmatpush.msra.mxu0 %v220
    %1192 = vmatpush.msra.mxu0 %v216
    %1193 = vmatpush.msra.mxu0 %v212
    %1194 = vmatpush.msra.mxu0 %v208
    %1195 = vmatpush.msra.mxu0 %v204
    %1196 = vmatpush.msra.mxu0 %v200
    %1197 = vmatpush.msra.mxu0 %v196
    %1198 = vmatpush.msra.mxu0 %v192
    %1199 = vmatpush.msra.mxu0 %v188
    %1200 = vmatmul.f32.gmra.mxu0 %v1178
    %v1201 = vpop.f32.mrf.mxu0
    %v1202 = vadd.f32 %v292, %v1201
    %1203 = vdwg.mxu0
    %1204 = vmatpush.msra.mxu0 %v249
    %1205 = vmatpush.msra.mxu0 %v245
    %1206 = vmatpush.msra.mxu0 %v241
    %1207 = vmatpush.msra.mxu0 %v237
    %1208 = vmatpush.msra.mxu0 %v233
    %1209 = vmatpush.msra.mxu0 %v229
    %1210 = vmatpush.msra.mxu0 %v225
    %1211 = vmatpush.msra.mxu0 %v221
    %1212 = vmatpush.msra.mxu0 %v217
    %1213 = vmatpush.msra.mxu0 %v213
    %1214 = vmatpush.msra.mxu0 %v209
    %1215 = vmatpush.msra.mxu0 %v205
    %1216 = vmatpush.msra.mxu0 %v201
    %1217 = vmatpush.msra.mxu0 %v197
    %1218 = vmatpush.msra.mxu0 %v193
    %1219 = vmatpush.msra.mxu0 %v189
    %1220 = vmatmul.f32.gmra.mxu0 %v1178
    %v1221 = vpop.f32.mrf.mxu0
    %v1222 = vadd.f32 %v293, %v1221
    %1223 = vdwg.mxu0
    %1224 = vmatpush.msra.mxu0 %v250
    %1225 = vmatpush.msra.mxu0 %v246
    %1226 = vmatpush.msra.mxu0 %v242
    %1227 = vmatpush.msra.mxu0 %v238
    %1228 = vmatpush.msra.mxu0 %v234
    %1229 = vmatpush.msra.mxu0 %v230
    %1230 = vmatpush.msra.mxu0 %v226
    %1231 = vmatpush.msra.mxu0 %v222
    %1232 = vmatpush.msra.mxu0 %v218
    %1233 = vmatpush.msra.mxu0 %v214
    %1234 = vmatpush.msra.mxu0 %v210
    %1235 = vmatpush.msra.mxu0 %v206
    %1236 = vmatpush.msra.mxu0 %v202
    %1237 = vmatpush.msra.mxu0 %v198
    %1238 = vmatpush.msra.mxu0 %v194
    %1239 = vmatpush.msra.mxu0 %v190
    %1240 = vmatmul.f32.gmra.mxu0 %v1178
    %v1241 = vpop.f32.mrf.mxu0
    %v1242 = vadd.f32 %v294, %v1241
    %1243 = vdwg.mxu0
    %1244 = vmatpush.msra.mxu0 %v251
    %1245 = vmatpush.msra.mxu0 %v247
    %1246 = vmatpush.msra.mxu0 %v243
    %1247 = vmatpush.msra.mxu0 %v239
    %1248 = vmatpush.msra.mxu0 %v235
    %1249 = vmatpush.msra.mxu0 %v231
    %1250 = vmatpush.msra.mxu0 %v227
    %1251 = vmatpush.msra.mxu0 %v223
    %1252 = vmatpush.msra.mxu0 %v219
    %1253 = vmatpush.msra.mxu0 %v215
    %1254 = vmatpush.msra.mxu0 %v211
    %1255 = vmatpush.msra.mxu0 %v207
    %1256 = vmatpush.msra.mxu0 %v203
    %1257 = vmatpush.msra.mxu0 %v199
    %1258 = vmatpush.msra.mxu0 %v195
    %1259 = vmatpush.msra.mxu0 %v191
    %1260 = vmatmul.f32.gmra.mxu0 %v1178
    %v1261 = vpop.f32.mrf.mxu0
    %v1262 = vadd.f32 %v295, %v1261
    %1263 = vdwg.mxu0
    %v1265 = vrot.slane %v1202, 1
    %v1266 = vperm.slane %v1202, 0
    %v1267 = vperm.slane %v1265, 0
    %v1270 = vadd.f32 %v182, %v1266
    %v1271 = vadd.f32 %v185, %v1267
    %v1272 = vtanh.pop %v1270
    %v1273 = vtanh.pop %v1271
    %v1274 = vmul.f32 %v1272, %v391
    %v1275 = vmul.f32 %v1273, %v391
    %1276 = vadd.xlane.f32.xlu0 %v1274
    %v1277 = vpop.xlane.xlu0 %1276
    %1278 = vadd.xlane.f32.xlu0 %v1275
    %v1279 = vpop.xlane.xlu0 %1278
    %v1280 = vrot.slane %v1277, 4
    %v1281 = vmax.f32 %v1277, %v1280
    %v1282 = vrot.slane %v1281, 2
    %v1283 = vmax.f32 %v1281, %v1282
    %v1284 = vrot.slane %v1283, 1
    %v1285 = vmax.f32 %v1283, %v1284
    %v1286 = vrot.slane %v1279, 4
    %v1287 = vmax.f32 %v1279, %v1286
    %v1288 = vrot.slane %v1287, 2
    %v1289 = vmax.f32 %v1287, %v1288
    %v1290 = vrot.slane %v1289, 1
    %v1291 = vmax.f32 %v1289, %v1290
    %v1292 = vsub.f32 %v1277, %v1285
    %v1293 = vsub.f32 %v1279, %v1291
    %v1294 = vmul.f32 %v1292, 1.442695
    %v1295 = vpow.pop %v1294
    %v1296 = vmul.f32 %v1293, 1.442695
    %v1297 = vpow.pop %v1296
    %v1298 = vrot.slane %v1295, 4
    %v1299 = vadd.f32 %v1295, %v1298
    %v1300 = vrot.slane %v1299, 2
    %v1301 = vadd.f32 %v1299, %v1300
    %v1302 = vrot.slane %v1301, 1
    %v1303 = vadd.f32 %v1301, %v1302
    %v1304 = vrot.slane %v1297, 4
    %v1305 = vadd.f32 %v1297, %v1304
    %v1306 = vrot.slane %v1305, 2
    %v1307 = vadd.f32 %v1305, %v1306
    %v1308 = vrot.slane %v1307, 1
    %v1309 = vadd.f32 %v1307, %v1308
    %v1310 = vrcp.pop %v1303
    %v1311 = vrcp.pop %v1309
    %v1312 = vmul.f32 %v1295, %v1310
    %v1313 = vmul.f32 %v1297, %v1311
    %v1314 = vmul.f32 %v1312, %v143
    %v1315 = vmul.f32 %v1313, %v144
    %v1316 = vsel %vm157, %v1314, 0.0
    %v1317 = vrot.slane %v1316, 4
    %v1318 = vadd.f32 %v1316, %v1317
    %v1319 = vrot.slane %v1318, 2
    %v1320 = vadd.f32 %v1318, %v1319
    %v1321 = vrot.slane %v1320, 1
    %v1322 = vadd.f32 %v1320, %v1321
    %v1323 = vsel %vm157, %v1315, 0.0
    %v1324 = vrot.slane %v1323, 4
    %v1325 = vadd.f32 %v1323, %v1324
    %v1326 = vrot.slane %v1325, 2
    %v1327 = vadd.f32 %v1325, %v1326
    %v1328 = vrot.slane %v1327, 1
    %v1329 = vadd.f32 %v1327, %v1328
    %s1330 = sld [smem:[#allocation2 + $0x180]]
    %s1331 = smul.u32 %s1330, 3
    %s1332 = scalar_lea.vmem [#allocation13], %s1331
    %v1333 = vld [vmem:[%s1332] sm:$0x7]
    %s1334 = sld [smem:[#allocation2 + $0x181]]
    %s1335 = smul.u32 %s1334, 3
    %s1336 = scalar_lea.vmem [#allocation13], %s1335
    %v1337 = vld [vmem:[%s1336] sm:$0x7]
    %v1339 = vperm.slane %v1333, 0
    %v1340 = vperm.slane %v1333, 1
    %v1341 = vperm.slane %v1333, 2
    %v1346 = vperm.slane %v1337, 0
    %v1347 = vperm.slane %v1337, 1
    %v1348 = vperm.slane %v1337, 2
    %v1352 = vsel %vm471, %v1339, %v1346
    %v1353 = vsel %vm471, %v1340, %v1347
    %v1354 = vsel %vm471, %v1341, %v1348
    %v1357 = vsel %vm477, %v1329, %v1322
    %v1358 = vsel %vm157, %v1357, 0
    %1360 = vmatpush.msra.mxu0 0.0
    %1361 = vmatpush.msra.mxu0 0.0
    %1362 = vmatpush.msra.mxu0 0.0
    %1363 = vmatpush.msra.mxu0 0.0
    %1364 = vmatpush.msra.mxu0 %v286
    %1365 = vmatpush.msra.mxu0 %v283
    %1366 = vmatpush.msra.mxu0 %v280
    %1367 = vmatpush.msra.mxu0 %v277
    %1368 = vmatpush.msra.mxu0 %v274
    %1369 = vmatpush.msra.mxu0 %v271
    %1370 = vmatpush.msra.mxu0 %v268
    %1371 = vmatpush.msra.mxu0 %v265
    %1372 = vmatpush.msra.mxu0 %v262
    %1373 = vmatpush.msra.mxu0 %v259
    %1374 = vmatpush.msra.mxu0 %v256
    %1375 = vmatpush.msra.mxu0 %v253
    %1376 = vmatmul.f32.gmra.mxu0 %v1358
    %v1377 = vpop.f32.mrf.mxu0
    %v1378 = vadd.f32 %v1352, %v1377
    %1379 = vdwg.mxu0
    %1380 = vmatpush.msra.mxu0 0.0
    %1381 = vmatpush.msra.mxu0 0.0
    %1382 = vmatpush.msra.mxu0 0.0
    %1383 = vmatpush.msra.mxu0 0.0
    %1384 = vmatpush.msra.mxu0 %v287
    %1385 = vmatpush.msra.mxu0 %v284
    %1386 = vmatpush.msra.mxu0 %v281
    %1387 = vmatpush.msra.mxu0 %v278
    %1388 = vmatpush.msra.mxu0 %v275
    %1389 = vmatpush.msra.mxu0 %v272
    %1390 = vmatpush.msra.mxu0 %v269
    %1391 = vmatpush.msra.mxu0 %v266
    %1392 = vmatpush.msra.mxu0 %v263
    %1393 = vmatpush.msra.mxu0 %v260
    %1394 = vmatpush.msra.mxu0 %v257
    %1395 = vmatpush.msra.mxu0 %v254
    %1396 = vmatmul.f32.gmra.mxu0 %v1358
    %v1397 = vpop.f32.mrf.mxu0
    %v1398 = vadd.f32 %v1353, %v1397
    %1399 = vdwg.mxu0
    %1400 = vmatpush.msra.mxu0 0.0
    %1401 = vmatpush.msra.mxu0 0.0
    %1402 = vmatpush.msra.mxu0 0.0
    %1403 = vmatpush.msra.mxu0 0.0
    %1404 = vmatpush.msra.mxu0 %v288
    %1405 = vmatpush.msra.mxu0 %v285
    %1406 = vmatpush.msra.mxu0 %v282
    %1407 = vmatpush.msra.mxu0 %v279
    %1408 = vmatpush.msra.mxu0 %v276
    %1409 = vmatpush.msra.mxu0 %v273
    %1410 = vmatpush.msra.mxu0 %v270
    %1411 = vmatpush.msra.mxu0 %v267
    %1412 = vmatpush.msra.mxu0 %v264
    %1413 = vmatpush.msra.mxu0 %v261
    %1414 = vmatpush.msra.mxu0 %v258
    %1415 = vmatpush.msra.mxu0 %v255
    %1416 = vmatmul.f32.gmra.mxu0 %v1358
    %v1417 = vpop.f32.mrf.mxu0
    %v1418 = vadd.f32 %v1354, %v1417
    %1419 = vdwg.mxu0
    %v1420 = vadd.f32 %v1378, %v542
    %v1421 = vadd.f32 %v1398, %v543
    %v1422 = vadd.f32 %v1418, %v544
    %v1423 = vadd.f32 %v1420, %v1222
    %v1424 = vxor.u32 %v1423, 2147483648
    %v1425 = vmul.f32 %v1424, 1.442695
    %v1426 = vpow.pop %v1425
    %v1427 = vadd.f32 %v1426, 1.0
    %v1428 = vrcp.pop %v1427
    %v1429 = vmul.f32 %v1427, %v1428
    %v1430 = vsub.f32 1.0, %v1429
    %v1431 = vmul.f32 %v1428, %v1430
    %v1432 = vadd.f32 %v1428, %v1431
    %vm1433 = vweird.f32 %v1427
    %vm1434 = vweird.f32 %v1428
    %vm1435 = vmor %vm1433, %vm1434
    %v1436 = vsel %vm1435, %v1428, %v1432
    %v1437 = vand.u32 2147483647, %v1427
    %vm1438 = vcmp.eq.f32.partialorder %v1437, 8.507059e+37
    %v1439 = vand.u32 %v1427, 2147483648
    %v1440 = vor.u32 1.1754944e-38, %v1439
    %v1441 = vsel %vm1438, %v1440, %v1436
    %v1442 = vmul.f32 1.0, %v1441
    %v1443 = vadd.f32 %v1421, %v1242
    %v1444 = vxor.u32 %v1443, 2147483648
    %v1445 = vmul.f32 %v1444, 1.442695
    %v1446 = vpow.pop %v1445
    %v1447 = vadd.f32 %v1446, 1.0
    %v1448 = vrcp.pop %v1447
    %v1449 = vmul.f32 %v1447, %v1448
    %v1450 = vsub.f32 1.0, %v1449
    %v1451 = vmul.f32 %v1448, %v1450
    %v1452 = vadd.f32 %v1448, %v1451
    %vm1453 = vweird.f32 %v1447
    %vm1454 = vweird.f32 %v1448
    %vm1455 = vmor %vm1453, %vm1454
    %v1456 = vsel %vm1455, %v1448, %v1452
    %v1457 = vand.u32 2147483647, %v1447
    %vm1458 = vcmp.eq.f32.partialorder %v1457, 8.507059e+37
    %v1459 = vand.u32 %v1447, 2147483648
    %v1460 = vor.u32 1.1754944e-38, %v1459
    %v1461 = vsel %vm1458, %v1460, %v1456
    %v1462 = vmul.f32 1.0, %v1461
    %v1463 = vmul.f32 %v1442, %v1262
    %v1464 = vadd.f32 %v1422, %v1463
    %v1465 = vtanh.pop %v1464
    %v1466 = vsub.f32 1.0, %v1462
    %v1467 = vmul.f32 %v1466, %v1465
    %v1468 = vmul.f32 %v1462, %v1178
    %v1469 = vadd.f32 %v1467, %v1468
    %s1470 = scalar_lea.vmem [#allocation15], 6
    %1471 = vst [vmem:[%s1470] sm:$0x3] %v1469
    %s1472 = scalar_lea.vmem %s11, 48
    %1473 = vst.msk [vmem:[%s1472] sm:$0xff] %vm599, %v1312
    %1474 = vst.msk [vmem:[%s1472 + $0x8] sm:$0xff] %vm599, %v1313
    // Predicated region
    $region70: #{tpu_custom_call.1} parent=1 // pred_check
      _
    $region71: #{tpu_custom_call.1} parent=1 // pred_check_branch
      %1476 = sbr.rel (0) target = $region73
    $region72: #{tpu_custom_call.1} parent=1 // pred_region
      %1478 = vsyncadd [#allocation4], 0
      %s1479 = sshll.u32 [#allocation15], 4
      %s1480 = int_to_ptr.vmem [resolvable:$true] %s1479
      %s1481 = sshll.u32 %s10, 4
      %s1482 = int_to_ptr.hbm [resolvable:$true] %s1481
      %1487 = dma.vmem_to_hbm [thread:$0]  %s1480, 128, %s1482, [#allocation4], 32, 32, 2
    $region73: #{tpu_custom_call.1} parent=1 // pred_fallthru
      _
    // Predicated region
    $region74: #{tpu_custom_call.1} parent=1 // pred_check
      _
    $region75: #{tpu_custom_call.1} parent=1 // pred_check_branch
      %1489 = sbr.rel (0) target = $region77
    $region76: #{tpu_custom_call.1} parent=1 // pred_region
      _
    $region77: #{tpu_custom_call.1} parent=1 // pred_fallthru
      _
    // Predicated region
    $region78: #{tpu_custom_call.1} parent=1 // pred_check
      _
    $region79: #{tpu_custom_call.1} parent=1 // pred_check_branch
      %1491 = sbr.rel (0) target = $region81
    $region80: #{tpu_custom_call.1} parent=1 // pred_region
      %1493 = dma.done [#allocation4], 128
    $region81: #{tpu_custom_call.1} parent=1 // pred_fallthru
      _
    // Predicated region
    $region82: #{tpu_custom_call.1} parent=1 // pred_check
      _
    $region83: #{tpu_custom_call.1} parent=1 // pred_check_branch
      %1495 = sbr.rel (0) target = $region85
    $region84: #{tpu_custom_call.1} parent=1 // pred_region
      _
    $region85: #{tpu_custom_call.1} parent=1 // pred_fallthru
      _
    %1496 = vsyncpa [#allocation3], 1
    %1497 = vsyncpa [#allocation8], 1
    %1498 = vsyncpa [#allocation11], 1
    %1499 = vsyncpa [#allocation14], 1
    %1500 = vsyncpa [#allocation4], 1
    %1501 = vsyncpa [#allocation5], 1

</llo_original>
